<compile_context>
chip_gen: v7x
topology: tpu7x:2x2x1
jax: 0.10.0
libtpu: 0.0.40
codegen_flags: <defaults>
</compile_context>

<pallas_src>
import functools

import jax
import jax.numpy as jnp
from jax.experimental import pallas as pl
from jax.experimental.pallas import tpu as pltpu


def _round_up(n: int, m: int) -> int:
    return ((n + m - 1) // m) * m


def _fused_mlp_kernel(*refs, num_layers: int):
    """Fused Linear(+Tanh) chain, feature-major, on one batch tile.

    refs = (xT_ref, w0_ref, b0_ref, ..., w{L-1}_ref, b{L-1}_ref, oT_ref)
      xT_ref : [In, bb]        batch on the lane axis
      w_j    : [out_j, in_j]   torch nn.Linear layout, VMEM-resident
      b_j    : [out_j, 1]      broadcast over lanes
      oT_ref : [out_dim, bb]   lane-dense, no feature padding
    """
    xT_ref = refs[0]
    oT_ref = refs[-1]
    h = xT_ref[...]                                     # f32
    for j in range(num_layers):
        w = refs[1 + 2 * j][...]
        b = refs[2 + 2 * j][...]
        # MXU result is bb lanes wide (not 32), so push count stays low.
        h = jnp.dot(w, h, preferred_element_type=jnp.float32,
                    precision=jax.lax.Precision.HIGHEST) + b
        if j < num_layers - 1:
            h = jnp.tanh(h)                             # EUP slot
    oT_ref[...] = h


def mlp_forward(x, params, *, block_b: int = 4096, min_pallas_batch: int = 256):
    """Fused MLP forward, semantics of torch MLP(sizes, activation=Tanh).

    x: [B, In] f32.  params: list of (W [out, in], b [out]) f32 (torch layout).
    Tanh after every layer except the last (output_activation=None).
    Returns [B, out_dim].
    """
    B, In = x.shape
    num_layers = len(params)
    out_dim = params[-1][0].shape[0]

    # Small-batch fast path: a custom call + HBM<->VMEM DMAs loses to letting
    # XLA fuse three tiny GEMMs.  (The demo forces the kernel path instead.)
    if B < min_pallas_batch:
        h = x
        for j, (W, b) in enumerate(params):
            h = jnp.dot(h, W.T, precision=jax.lax.Precision.HIGHEST) + b
            if j < num_layers - 1:
                h = jnp.tanh(h)
        return h

    # --- feature-major tiling -------------------------------------------------
    B_lane = _round_up(B, 128)                 # lane-aligned batch

    # Batch tile (multiple of 128 lanes).  When there is enough work per core,
    # cap the tile at half the batch so grid >= 2 and the "parallel" axis
    # really lands on both of v7x's TensorCores (no-op on v5e/v6e).
    if B_lane >= 1024:
        half = _round_up((B_lane + 1) // 2, 128)
        bb = min(block_b, half)
    else:
        bb = B_lane
    bb = max(128, _round_up(bb, 128))
    B_pad = _round_up(B, bb)

    xT = x.T                                   # [In, B]  (layout plumbing, cheap)
    if B_pad != B:
        xT = jnp.pad(xT, ((0, 0), (0, B_pad - B)))

    grid = (B_pad // bb,)

    # Activations stream block-by-block over the lane axis; weights/biases stay
    # resident (constant index map across the batch grid).
    in_specs = [pl.BlockSpec((In, bb), lambda i: (0, i))]
    args = [xT]
    for W, b in params:
        in_specs.append(pl.BlockSpec(W.shape, lambda i: (0, 0)))
        in_specs.append(pl.BlockSpec((W.shape[0], 1), lambda i: (0, 0)))
        args.append(W)
        args.append(b.reshape(-1, 1))
    # NOTE: weights never change across grid steps; single-buffering them
    # (pl.Buffered(1)) would save a few KiB of VMEM but is negligible here.

    flops = 2 * B_pad * sum(W.shape[0] * W.shape[1] for W, _ in params)
    transcendentals = B_pad * sum(W.shape[0] for W, _ in params[:-1])
    bytes_accessed = sum(int(a.size) * 4 for a in args) + B_pad * out_dim * 4

    kernel = functools.partial(_fused_mlp_kernel, num_layers=num_layers)
    outT = pl.pallas_call(
        kernel,
        out_shape=jax.ShapeDtypeStruct((out_dim, B_pad), jnp.float32),
        grid=grid,
        in_specs=in_specs,
        out_specs=pl.BlockSpec((out_dim, bb), lambda i: (0, i)),
        compiler_params=pltpu.CompilerParams(
            dimension_semantics=("parallel",),     # batch over v7x's 2 TCs
            vmem_limit_bytes=32 << 20),            # lift v5e's 16 MiB default
        cost_estimate=pl.CostEstimate(
            flops=flops,
            transcendentals=transcendentals,
            bytes_accessed=bytes_accessed),
    )(*args)

    return outT[:, :B].T                       # -> [B, out_dim]


def init_mlp_params(key, sizes):
    """torch.nn.Linear default init (U(-k, k), k=1/sqrt(fan_in)), torch layout.

    Returns list of (W [out, in], b [out]).
    """
    params = []
    for j in range(len(sizes) - 1):
        fan_in, fan_out = sizes[j], sizes[j + 1]
        key, kw, kb = jax.random.split(key, 3)
        bound = 1.0 / jnp.sqrt(jnp.float32(fan_in))
        W = jax.random.uniform(kw, (fan_out, fan_in), jnp.float32, -bound, bound)
        b = jax.random.uniform(kb, (fan_out,), jnp.float32, -bound, bound)
        params.append((W, b))
    return params


if __name__ == "__main__":
    # CartPole-ish sizes: obs_dim=4, two hidden layers of 32, act_dim=2.
    sizes = [4, 32, 32, 2]
    batch = 2

    key = jax.random.PRNGKey(0)
    key, kx = jax.random.split(key)
    x = jax.random.normal(kx, (batch, sizes[0]), jnp.float32)

    params = init_mlp_params(key, sizes)

    # Force the Pallas path (min_pallas_batch=0) so the kernel itself is
    # exercised at this tiny demo size; production calls keep the default and
    # take the fused-XLA fast path for small batches.
    fwd = jax.jit(functools.partial(mlp_forward, min_pallas_batch=0))
    out = jax.block_until_ready(fwd(x, params))

    # Pure-JAX reference (same math, full f32 precision).
    ref = x
    for j, (W, b) in enumerate(params):
        ref = jnp.dot(ref, W.T, precision=jax.lax.Precision.HIGHEST) + b
        if j < len(params) - 1:
            ref = jnp.tanh(ref)

    assert out.shape == (batch, sizes[-1])
    assert jnp.allclose(out, ref, atol=1e-5, rtol=1e-5)

    print("KERNEL_OK")
</pallas_src>

<mosaic_0001>
module attributes {stable_mosaic.version = 11 : i64} {
  func.func @_fused_mlp_kernel(%arg0: i32, %arg1: memref<4x128xf32, #tpu.memory_space<vmem>>, %arg2: memref<32x4xf32, #tpu.memory_space<vmem>>, %arg3: memref<32x1xf32, #tpu.memory_space<vmem>>, %arg4: memref<32x32xf32, #tpu.memory_space<vmem>>, %arg5: memref<32x1xf32, #tpu.memory_space<vmem>>, %arg6: memref<2x32xf32, #tpu.memory_space<vmem>>, %arg7: memref<2x1xf32, #tpu.memory_space<vmem>>, %arg8: memref<2x128xf32, #tpu.memory_space<vmem>>) attributes {dimension_semantics = [#tpu.dimension_semantics<parallel>], iteration_bounds = array<i64: 1>, scalar_prefetch = 0 : i64, scratch_operands = 0 : i64, tpu.core_type = #tpu.core_type<tc>, window_params = [{transform_indices = @transform_0, window_bounds = array<i64: 4, 128>}, {pipeline_mode = #tpu.pipeline_mode<synchronous>, transform_indices = @transform_1, window_bounds = array<i64: 32, 4>}, {pipeline_mode = #tpu.pipeline_mode<synchronous>, transform_indices = @transform_2, window_bounds = array<i64: 32, 1>}, {pipeline_mode = #tpu.pipeline_mode<synchronous>, transform_indices = @transform_3, window_bounds = array<i64: 32, 32>}, {pipeline_mode = #tpu.pipeline_mode<synchronous>, transform_indices = @transform_4, window_bounds = array<i64: 32, 1>}, {pipeline_mode = #tpu.pipeline_mode<synchronous>, transform_indices = @transform_5, window_bounds = array<i64: 2, 32>}, {pipeline_mode = #tpu.pipeline_mode<synchronous>, transform_indices = @transform_6, window_bounds = array<i64: 2, 1>}, {transform_indices = @transform_7, window_bounds = array<i64: 2, 128>}]} {
    %c0 = arith.constant 0 : index
    %c0_0 = arith.constant 0 : index
    %0 = vector.load %arg1[%c0, %c0_0] : memref<4x128xf32, #tpu.memory_space<vmem>>, vector<4x128xf32>
    %c0_1 = arith.constant 0 : index
    %c0_2 = arith.constant 0 : index
    %1 = vector.load %arg2[%c0_1, %c0_2] : memref<32x4xf32, #tpu.memory_space<vmem>>, vector<32x4xf32>
    %c0_3 = arith.constant 0 : index
    %c0_4 = arith.constant 0 : index
    %2 = vector.load %arg3[%c0_3, %c0_4] : memref<32x1xf32, #tpu.memory_space<vmem>>, vector<32x1xf32>
    %cst = arith.constant dense<0.000000e+00> : vector<32x128xf32>
    %3 = tpu.matmul %1, %0, %cst {dimension_numbers = #tpu.dot_dimension_numbers<[1], [0], [0], [1], [0, 0, 1, 1], [], []>, precision = #tpu.contract_precision<fp32>} : vector<32x4xf32>, vector<4x128xf32>, vector<32x128xf32> -> vector<32x128xf32>
    %4 = vector.broadcast %2 : vector<32x1xf32> to vector<32x128xf32>
    %5 = arith.addf %3, %4 : vector<32x128xf32>
    %6 = math.tanh %5 : vector<32x128xf32>
    %c0_5 = arith.constant 0 : index
    %c0_6 = arith.constant 0 : index
    %7 = vector.load %arg4[%c0_5, %c0_6] : memref<32x32xf32, #tpu.memory_space<vmem>>, vector<32x32xf32>
    %c0_7 = arith.constant 0 : index
    %c0_8 = arith.constant 0 : index
    %8 = vector.load %arg5[%c0_7, %c0_8] : memref<32x1xf32, #tpu.memory_space<vmem>>, vector<32x1xf32>
    %cst_9 = arith.constant dense<0.000000e+00> : vector<32x128xf32>
    %9 = tpu.matmul %7, %6, %cst_9 {dimension_numbers = #tpu.dot_dimension_numbers<[1], [0], [0], [1], [0, 0, 1, 1], [], []>, precision = #tpu.contract_precision<fp32>} : vector<32x32xf32>, vector<32x128xf32>, vector<32x128xf32> -> vector<32x128xf32>
    %10 = vector.broadcast %8 : vector<32x1xf32> to vector<32x128xf32>
    %11 = arith.addf %9, %10 : vector<32x128xf32>
    %12 = math.tanh %11 : vector<32x128xf32>
    %c0_10 = arith.constant 0 : index
    %c0_11 = arith.constant 0 : index
    %13 = vector.load %arg6[%c0_10, %c0_11] : memref<2x32xf32, #tpu.memory_space<vmem>>, vector<2x32xf32>
    %c0_12 = arith.constant 0 : index
    %c0_13 = arith.constant 0 : index
    %14 = vector.load %arg7[%c0_12, %c0_13] : memref<2x1xf32, #tpu.memory_space<vmem>>, vector<2x1xf32>
    %cst_14 = arith.constant dense<0.000000e+00> : vector<2x128xf32>
    %15 = tpu.matmul %13, %12, %cst_14 {dimension_numbers = #tpu.dot_dimension_numbers<[1], [0], [0], [1], [0, 0, 1, 1], [], []>, precision = #tpu.contract_precision<fp32>} : vector<2x32xf32>, vector<32x128xf32>, vector<2x128xf32> -> vector<2x128xf32>
    %16 = vector.broadcast %14 : vector<2x1xf32> to vector<2x128xf32>
    %17 = arith.addf %15, %16 : vector<2x128xf32>
    %c0_15 = arith.constant 0 : index
    %c0_16 = arith.constant 0 : index
    %18 = vector.load %arg8[%c0_15, %c0_16] : memref<2x128xf32, #tpu.memory_space<vmem>>, vector<2x128xf32>
    tpu.vector_store %arg8[%c0_15, %c0_16], %17 {strides = array<i32>} : memref<2x128xf32, #tpu.memory_space<vmem>>, vector<2x128xf32>,
    return
  }
  func.func @transform_0(%arg0: i32) -> (i32, i32) {
    %c0_i32 = arith.constant 0 : i32
    %c0_i32_0 = arith.constant 0 : i32
    return %c0_i32, %arg0 : i32, i32
  }
  func.func @transform_1(%arg0: i32) -> (i32, i32) {
    %c0_i32 = arith.constant 0 : i32
    %c0_i32_0 = arith.constant 0 : i32
    %c0_i32_1 = arith.constant 0 : i32
    return %c0_i32, %c0_i32_0 : i32, i32
  }
  func.func @transform_2(%arg0: i32) -> (i32, i32) {
    %c0_i32 = arith.constant 0 : i32
    %c0_i32_0 = arith.constant 0 : i32
    %c0_i32_1 = arith.constant 0 : i32
    return %c0_i32, %c0_i32_0 : i32, i32
  }
  func.func @transform_3(%arg0: i32) -> (i32, i32) {
    %c0_i32 = arith.constant 0 : i32
    %c0_i32_0 = arith.constant 0 : i32
    %c0_i32_1 = arith.constant 0 : i32
    return %c0_i32, %c0_i32_0 : i32, i32
  }
  func.func @transform_4(%arg0: i32) -> (i32, i32) {
    %c0_i32 = arith.constant 0 : i32
    %c0_i32_0 = arith.constant 0 : i32
    %c0_i32_1 = arith.constant 0 : i32
    return %c0_i32, %c0_i32_0 : i32, i32
  }
  func.func @transform_5(%arg0: i32) -> (i32, i32) {
    %c0_i32 = arith.constant 0 : i32
    %c0_i32_0 = arith.constant 0 : i32
    %c0_i32_1 = arith.constant 0 : i32
    return %c0_i32, %c0_i32_0 : i32, i32
  }
  func.func @transform_6(%arg0: i32) -> (i32, i32) {
    %c0_i32 = arith.constant 0 : i32
    %c0_i32_0 = arith.constant 0 : i32
    %c0_i32_1 = arith.constant 0 : i32
    return %c0_i32, %c0_i32_0 : i32, i32
  }
  func.func @transform_7(%arg0: i32) -> (i32, i32) {
    %c0_i32 = arith.constant 0 : i32
    %c0_i32_0 = arith.constant 0 : i32
    return %c0_i32, %arg0 : i32, i32
  }
}

</mosaic_0001>

<llo_original>
// kernel: mlp_forward.1
$region0: #{mlp_forward.1}
  #allocation0 [shape = 'u32[]', space=smem, size = 0x4, offset = 0x4, fixed_abs, tag = 'smem constant byte address 0x4 - core index']
  #allocation1 [shape = 'u32[144,128]{1,0:T(1,128)}', space=vmem, size = 0x12000, scoped, tag = 'internal scratch']
  %s0 = inlined_call_operand.vmem [shape: f32[4,128], index: 0, kind: input, shape index: {}]
  %s1 = inlined_call_operand.vmem [shape: f32[32,4], index: 1, kind: input, shape index: {}]
  %s2 = inlined_call_operand.vmem [shape: f32[32,1], index: 2, kind: input, shape index: {}]
  %s3 = inlined_call_operand.vmem [shape: f32[32,32], index: 3, kind: input, shape index: {}]
  %s4 = inlined_call_operand.vmem [shape: f32[32,1], index: 4, kind: input, shape index: {}]
  %s5 = inlined_call_operand.vmem [shape: f32[2,32], index: 5, kind: input, shape index: {}]
  %s6 = inlined_call_operand.vmem [shape: f32[2,1], index: 6, kind: input, shape index: {}]
  %s7 = inlined_call_operand.vmem [shape: f32[2,128], index: 7, kind: output, shape index: {}]
  %s8 = sld [smem:[#allocation0]]
  $region38: #{mlp_forward.1} parent=0
    _
  %s10 = ssub.s32 1, %s8
  %s11 = scalar_select 0, %s10, %s8
  // Predicated region
  $region2: #{mlp_forward.1} parent=0 // pred_check
    _
  $region3: #{mlp_forward.1} parent=0 // pred_check_branch
    %13 = sbr.rel (0) target = $region5
  $region4: #{mlp_forward.1} parent=0 // pred_region
    _
  $region5: #{mlp_forward.1} parent=0 // pred_fallthru
    _
  // Predicated region
  $region6: #{mlp_forward.1} parent=0 // pred_check
    _
  $region7: #{mlp_forward.1} parent=0 // pred_check_branch
    %15 = sbr.rel (0) target = $region9
  $region8: #{mlp_forward.1} parent=0 // pred_region
    _
  $region9: #{mlp_forward.1} parent=0 // pred_fallthru
    _
  // Predicated region
  $region10: #{mlp_forward.1} parent=0 // pred_check
    _
  $region11: #{mlp_forward.1} parent=0 // pred_check_branch
    %17 = sbr.rel (0) target = $region13
  $region12: #{mlp_forward.1} parent=0 // pred_region
    _
  $region13: #{mlp_forward.1} parent=0 // pred_fallthru
    _
  // Predicated region
  $region14: #{mlp_forward.1} parent=0 // pred_check
    _
  $region15: #{mlp_forward.1} parent=0 // pred_check_branch
    %19 = sbr.rel (0) target = $region17
  $region16: #{mlp_forward.1} parent=0 // pred_region
    _
  $region17: #{mlp_forward.1} parent=0 // pred_fallthru
    _
  // Predicated region
  $region18: #{mlp_forward.1} parent=0 // pred_check
    _
  $region19: #{mlp_forward.1} parent=0 // pred_check_branch
    %21 = sbr.rel (0) target = $region21
  $region20: #{mlp_forward.1} parent=0 // pred_region
    _
  $region21: #{mlp_forward.1} parent=0 // pred_fallthru
    _
  // Predicated region
  $region22: #{mlp_forward.1} parent=0 // pred_check
    _
  $region23: #{mlp_forward.1} parent=0 // pred_check_branch
    %23 = sbr.rel (0) target = $region25
  $region24: #{mlp_forward.1} parent=0 // pred_region
    _
  $region25: #{mlp_forward.1} parent=0 // pred_fallthru
    _
  // Predicated region
  $region26: #{mlp_forward.1} parent=0 // pred_check
    _
  $region27: #{mlp_forward.1} parent=0 // pred_check_branch
    %25 = sbr.rel (0) target = $region29
  $region28: #{mlp_forward.1} parent=0 // pred_region
    _
  $region29: #{mlp_forward.1} parent=0 // pred_fallthru
    _
  %v26 = vld [vmem:[%s0] sm:$0xf]
  %v27 = vld [vmem:[%s1] sm:$0xff]
  %v28 = vld [vmem:[%s1 + $0x8] sm:$0xff]
  %v29 = vld [vmem:[%s1 + $0x10] sm:$0xff]
  %v30 = vld [vmem:[%s1 + $0x18] sm:$0xff]
  %v31 = vld [vmem:[%s2] sm:$0xff]
  %v32 = vld [vmem:[%s2 + $0x8] sm:$0xff]
  %v33 = vld [vmem:[%s2 + $0x10] sm:$0xff]
  %v34 = vld [vmem:[%s2 + $0x18] sm:$0xff]
  %36 = vset.pattern.permute.xlu0 0
  %37 = vperm.xlu0 %36, %v31
  %v38 = vpop.permute.xlu0 %37
  %41 = vset.pattern.permute.xlu0 0
  %42 = vperm.xlu0 %41, %v32
  %v43 = vpop.permute.xlu0 %42
  %46 = vset.pattern.permute.xlu0 0
  %47 = vperm.xlu0 %46, %v33
  %v48 = vpop.permute.xlu0 %47
  %51 = vset.pattern.permute.xlu0 0
  %52 = vperm.xlu0 %51, %v34
  %v53 = vpop.permute.xlu0 %52
  %vm55 = vcmask 31744
  %v57 = vsel %vm55, %v27, 0
  %v60 = vsel %vm55, %v28, 0
  %v63 = vsel %vm55, %v29, 0
  %v66 = vsel %vm55, %v30, 0
  %vm68 = vcmask 1043456
  %v70 = vsel %vm68, %v26, 0
  %72 = vmatprep.subr.mxu0 0.0
  %v73 = vand.u32 %v70, 4294901760
  %74 = vmatpush1.msra.mxu0 %v73
  %75 = vmatprep.subr.mxu0 0.0
  %76 = vmatpush1.msra.mxu0 0.0
  %77 = vmatprep.subr.mxu0 0.0
  %78 = vmatpush1.msra.mxu0 0.0
  %79 = vmatprep.subr.mxu0 0.0
  %80 = vmatpush1.msra.mxu0 0.0
  %81 = vmatprep.subr.mxu0 0.0
  %82 = vmatpush1.msra.mxu0 0.0
  %83 = vmatprep.subr.mxu0 0.0
  %84 = vmatpush1.msra.mxu0 0.0
  %85 = vmatprep.subr.mxu0 0.0
  %86 = vmatpush1.msra.mxu0 0.0
  %87 = vmatprep.subr.mxu0 0.0
  %88 = vmatpush1.msra.mxu0 0.0
  %89 = vmatprep.subr.mxu0 0.0
  %90 = vmatpush1.msra.mxu0 0.0
  %91 = vmatprep.subr.mxu0 0.0
  %92 = vmatpush1.msra.mxu0 0.0
  %93 = vmatprep.subr.mxu0 0.0
  %94 = vmatpush1.msra.mxu0 0.0
  %95 = vmatprep.subr.mxu0 0.0
  %96 = vmatpush1.msra.mxu0 0.0
  %97 = vmatprep.subr.mxu0 0.0
  %98 = vmatpush1.msra.mxu0 0.0
  %99 = vmatprep.subr.mxu0 0.0
  %100 = vmatpush1.msra.mxu0 0.0
  %101 = vmatprep.subr.mxu0 0.0
  %102 = vmatpush1.msra.mxu0 0.0
  %103 = vmatprep.subr.mxu0 0.0
  %104 = vmatpush1.msra.mxu0 0.0
  %105 = vmatprep.subr.mxu0 0.0
  %106 = vmatpush1.msra.mxu0 0.0
  %107 = vmatprep.subr.mxu0 0.0
  %108 = vmatpush1.msra.mxu0 0.0
  %109 = vmatprep.subr.mxu0 0.0
  %110 = vmatpush1.msra.mxu0 0.0
  %111 = vmatprep.subr.mxu0 0.0
  %112 = vmatpush1.msra.mxu0 0.0
  %113 = vmatprep.subr.mxu0 0.0
  %114 = vmatpush1.msra.mxu0 0.0
  %115 = vmatprep.subr.mxu0 0.0
  %116 = vmatpush1.msra.mxu0 0.0
  %117 = vmatprep.subr.mxu0 0.0
  %118 = vmatpush1.msra.mxu0 0.0
  %119 = vmatprep.subr.mxu0 0.0
  %120 = vmatpush1.msra.mxu0 0.0
  %121 = vmatprep.subr.mxu0 0.0
  %122 = vmatpush1.msra.mxu0 0.0
  %123 = vmatprep.subr.mxu0 0.0
  %124 = vmatpush1.msra.mxu0 0.0
  %125 = vmatprep.subr.mxu0 0.0
  %126 = vmatpush1.msra.mxu0 0.0
  %127 = vmatprep.subr.mxu0 0.0
  %128 = vmatpush1.msra.mxu0 0.0
  %129 = vmatprep.subr.mxu0 0.0
  %130 = vmatpush1.msra.mxu0 0.0
  %131 = vmatprep.subr.mxu0 0.0
  %132 = vmatpush1.msra.mxu0 0.0
  %133 = vmatprep.subr.mxu0 0.0
  %134 = vmatpush1.msra.mxu0 0.0
  %135 = vmatprep.subr.mxu0 0.0
  %136 = vmatpush1.msra.mxu0 0.0
  %137 = vmatprep.mubr.f32.mxu0 0.0
  %v138 = vand.u32 %v57, 4294901760
  %v139 = vsub.f32 %v57, %v138
  %v140 = vand.u32 %v139, 4294901760
  %v141 = vsub.f32 %v139, %v140
  %v142 = vand.u32 %v141, 4294901760
  %143 = vmatmul.mubr.f32.gmra.mrb[0].mxu0 %v142
  %v144 = vpop.f32.mrb[0].mxu0
  %v145 = vadd.f32 %v38, %v144
  %v146 = vpop.f32.mrb[0].mxu0
  %147 = vmatprep.mubr.f32.mxu0 0.0
  %v148 = vand.u32 %v60, 4294901760
  %v149 = vsub.f32 %v60, %v148
  %v150 = vand.u32 %v149, 4294901760
  %v151 = vsub.f32 %v149, %v150
  %v152 = vand.u32 %v151, 4294901760
  %153 = vmatmul.mubr.f32.gmra.mrb[0].mxu0 %v152
  %v154 = vpop.f32.mrb[0].mxu0
  %v155 = vadd.f32 %v43, %v154
  %v156 = vpop.f32.mrb[0].mxu0
  %157 = vmatprep.mubr.f32.mxu0 0.0
  %v158 = vand.u32 %v63, 4294901760
  %v159 = vsub.f32 %v63, %v158
  %v160 = vand.u32 %v159, 4294901760
  %v161 = vsub.f32 %v159, %v160
  %v162 = vand.u32 %v161, 4294901760
  %163 = vmatmul.mubr.f32.gmra.mrb[0].mxu0 %v162
  %v164 = vpop.f32.mrb[0].mxu0
  %v165 = vadd.f32 %v48, %v164
  %v166 = vpop.f32.mrb[0].mxu0
  %167 = vmatprep.mubr.f32.mxu0 0.0
  %v168 = vand.u32 %v66, 4294901760
  %v169 = vsub.f32 %v66, %v168
  %v170 = vand.u32 %v169, 4294901760
  %v171 = vsub.f32 %v169, %v170
  %v172 = vand.u32 %v171, 4294901760
  %173 = vmatmul.mubr.f32.gmra.mrb[0].mxu0 %v172
  %v174 = vpop.f32.mrb[0].mxu0
  %v175 = vadd.f32 %v53, %v174
  %v176 = vpop.f32.mrb[0].mxu0
  %177 = vdwg.mxu0
  %178 = vmatprep.subr.mxu0 0.0
  %v179 = vand.u32 %v70, 4294901760
  %v180 = vsub.f32 %v70, %v179
  %v181 = vand.u32 %v180, 4294901760
  %v182 = vsub.f32 %v180, %v181
  %v183 = vand.u32 %v182, 4294901760
  %184 = vmatpush1.msra.mxu0 %v183
  %185 = vmatprep.subr.mxu0 0.0
  %186 = vmatpush1.msra.mxu0 0.0
  %187 = vmatprep.subr.mxu0 0.0
  %188 = vmatpush1.msra.mxu0 0.0
  %189 = vmatprep.subr.mxu0 0.0
  %190 = vmatpush1.msra.mxu0 0.0
  %191 = vmatprep.subr.mxu0 0.0
  %192 = vmatpush1.msra.mxu0 0.0
  %193 = vmatprep.subr.mxu0 0.0
  %194 = vmatpush1.msra.mxu0 0.0
  %195 = vmatprep.subr.mxu0 0.0
  %196 = vmatpush1.msra.mxu0 0.0
  %197 = vmatprep.subr.mxu0 0.0
  %198 = vmatpush1.msra.mxu0 0.0
  %199 = vmatprep.subr.mxu0 0.0
  %200 = vmatpush1.msra.mxu0 0.0
  %201 = vmatprep.subr.mxu0 0.0
  %202 = vmatpush1.msra.mxu0 0.0
  %203 = vmatprep.subr.mxu0 0.0
  %204 = vmatpush1.msra.mxu0 0.0
  %205 = vmatprep.subr.mxu0 0.0
  %206 = vmatpush1.msra.mxu0 0.0
  %207 = vmatprep.subr.mxu0 0.0
  %208 = vmatpush1.msra.mxu0 0.0
  %209 = vmatprep.subr.mxu0 0.0
  %210 = vmatpush1.msra.mxu0 0.0
  %211 = vmatprep.subr.mxu0 0.0
  %212 = vmatpush1.msra.mxu0 0.0
  %213 = vmatprep.subr.mxu0 0.0
  %214 = vmatpush1.msra.mxu0 0.0
  %215 = vmatprep.subr.mxu0 0.0
  %216 = vmatpush1.msra.mxu0 0.0
  %217 = vmatprep.subr.mxu0 0.0
  %218 = vmatpush1.msra.mxu0 0.0
  %219 = vmatprep.subr.mxu0 0.0
  %220 = vmatpush1.msra.mxu0 0.0
  %221 = vmatprep.subr.mxu0 0.0
  %222 = vmatpush1.msra.mxu0 0.0
  %223 = vmatprep.subr.mxu0 0.0
  %224 = vmatpush1.msra.mxu0 0.0
  %225 = vmatprep.subr.mxu0 0.0
  %226 = vmatpush1.msra.mxu0 0.0
  %227 = vmatprep.subr.mxu0 0.0
  %228 = vmatpush1.msra.mxu0 0.0
  %229 = vmatprep.subr.mxu0 0.0
  %230 = vmatpush1.msra.mxu0 0.0
  %231 = vmatprep.subr.mxu0 0.0
  %232 = vmatpush1.msra.mxu0 0.0
  %233 = vmatprep.subr.mxu0 0.0
  %234 = vmatpush1.msra.mxu0 0.0
  %235 = vmatprep.subr.mxu0 0.0
  %236 = vmatpush1.msra.mxu0 0.0
  %237 = vmatprep.subr.mxu0 0.0
  %238 = vmatpush1.msra.mxu0 0.0
  %239 = vmatprep.subr.mxu0 0.0
  %240 = vmatpush1.msra.mxu0 0.0
  %241 = vmatprep.subr.mxu0 0.0
  %242 = vmatpush1.msra.mxu0 0.0
  %243 = vmatprep.subr.mxu0 0.0
  %244 = vmatpush1.msra.mxu0 0.0
  %245 = vmatprep.subr.mxu0 0.0
  %246 = vmatpush1.msra.mxu0 0.0
  %247 = vmatprep.mubr.f32.mxu0 0.0
  %v248 = vand.u32 %v57, 4294901760
  %249 = vmatmul.mubr.f32.gmra.mrb[0].mxu0 %v248
  %v250 = vpop.f32.mrb[0].mxu0
  %v251 = vadd.f32 %v145, %v250
  %v252 = vpop.f32.mrb[0].mxu0
  %253 = vmatprep.mubr.f32.mxu0 0.0
  %v254 = vand.u32 %v60, 4294901760
  %255 = vmatmul.mubr.f32.gmra.mrb[0].mxu0 %v254
  %v256 = vpop.f32.mrb[0].mxu0
  %v257 = vadd.f32 %v155, %v256
  %v258 = vpop.f32.mrb[0].mxu0
  %259 = vmatprep.mubr.f32.mxu0 0.0
  %v260 = vand.u32 %v63, 4294901760
  %261 = vmatmul.mubr.f32.gmra.mrb[0].mxu0 %v260
  %v262 = vpop.f32.mrb[0].mxu0
  %v263 = vadd.f32 %v165, %v262
  %v264 = vpop.f32.mrb[0].mxu0
  %265 = vmatprep.mubr.f32.mxu0 0.0
  %v266 = vand.u32 %v66, 4294901760
  %267 = vmatmul.mubr.f32.gmra.mrb[0].mxu0 %v266
  %v268 = vpop.f32.mrb[0].mxu0
  %v269 = vadd.f32 %v175, %v268
  %v270 = vpop.f32.mrb[0].mxu0
  %271 = vdwg.mxu0
  %272 = vmatprep.subr.mxu0 0.0
  %v273 = vand.u32 %v70, 4294901760
  %v274 = vsub.f32 %v70, %v273
  %275 = vmatpush1.msra.mxu0 %v274
  %276 = vmatprep.subr.mxu0 0.0
  %277 = vmatpush1.msra.mxu0 0.0
  %278 = vmatprep.subr.mxu0 0.0
  %279 = vmatpush1.msra.mxu0 0.0
  %280 = vmatprep.subr.mxu0 0.0
  %281 = vmatpush1.msra.mxu0 0.0
  %282 = vmatprep.subr.mxu0 0.0
  %283 = vmatpush1.msra.mxu0 0.0
  %284 = vmatprep.subr.mxu0 0.0
  %285 = vmatpush1.msra.mxu0 0.0
  %286 = vmatprep.subr.mxu0 0.0
  %287 = vmatpush1.msra.mxu0 0.0
  %288 = vmatprep.subr.mxu0 0.0
  %289 = vmatpush1.msra.mxu0 0.0
  %290 = vmatprep.subr.mxu0 0.0
  %291 = vmatpush1.msra.mxu0 0.0
  %292 = vmatprep.subr.mxu0 0.0
  %293 = vmatpush1.msra.mxu0 0.0
  %294 = vmatprep.subr.mxu0 0.0
  %295 = vmatpush1.msra.mxu0 0.0
  %296 = vmatprep.subr.mxu0 0.0
  %297 = vmatpush1.msra.mxu0 0.0
  %298 = vmatprep.subr.mxu0 0.0
  %299 = vmatpush1.msra.mxu0 0.0
  %300 = vmatprep.subr.mxu0 0.0
  %301 = vmatpush1.msra.mxu0 0.0
  %302 = vmatprep.subr.mxu0 0.0
  %303 = vmatpush1.msra.mxu0 0.0
  %304 = vmatprep.subr.mxu0 0.0
  %305 = vmatpush1.msra.mxu0 0.0
  %306 = vmatprep.subr.mxu0 0.0
  %307 = vmatpush1.msra.mxu0 0.0
  %308 = vmatprep.subr.mxu0 0.0
  %309 = vmatpush1.msra.mxu0 0.0
  %310 = vmatprep.subr.mxu0 0.0
  %311 = vmatpush1.msra.mxu0 0.0
  %312 = vmatprep.subr.mxu0 0.0
  %313 = vmatpush1.msra.mxu0 0.0
  %314 = vmatprep.subr.mxu0 0.0
  %315 = vmatpush1.msra.mxu0 0.0
  %316 = vmatprep.subr.mxu0 0.0
  %317 = vmatpush1.msra.mxu0 0.0
  %318 = vmatprep.subr.mxu0 0.0
  %319 = vmatpush1.msra.mxu0 0.0
  %320 = vmatprep.subr.mxu0 0.0
  %321 = vmatpush1.msra.mxu0 0.0
  %322 = vmatprep.subr.mxu0 0.0
  %323 = vmatpush1.msra.mxu0 0.0
  %324 = vmatprep.subr.mxu0 0.0
  %325 = vmatpush1.msra.mxu0 0.0
  %326 = vmatprep.subr.mxu0 0.0
  %327 = vmatpush1.msra.mxu0 0.0
  %328 = vmatprep.subr.mxu0 0.0
  %329 = vmatpush1.msra.mxu0 0.0
  %330 = vmatprep.subr.mxu0 0.0
  %331 = vmatpush1.msra.mxu0 0.0
  %332 = vmatprep.subr.mxu0 0.0
  %333 = vmatpush1.msra.mxu0 0.0
  %334 = vmatprep.subr.mxu0 0.0
  %335 = vmatpush1.msra.mxu0 0.0
  %336 = vmatprep.subr.mxu0 0.0
  %337 = vmatpush1.msra.mxu0 0.0
  %338 = vmatprep.mubr.f32.mxu0 0.0
  %v339 = vand.u32 %v57, 4294901760
  %v340 = vsub.f32 %v57, %v339
  %341 = vmatmul.mubr.f32.gmra.mrb[0].mxu0 %v340
  %v342 = vpop.f32.mrb[0].mxu0
  %v343 = vadd.f32 %v251, %v342
  %v344 = vpop.f32.mrb[0].mxu0
  %345 = vmatprep.mubr.f32.mxu0 0.0
  %v346 = vand.u32 %v60, 4294901760
  %v347 = vsub.f32 %v60, %v346
  %348 = vmatmul.mubr.f32.gmra.mrb[0].mxu0 %v347
  %v349 = vpop.f32.mrb[0].mxu0
  %v350 = vadd.f32 %v257, %v349
  %v351 = vpop.f32.mrb[0].mxu0
  %352 = vmatprep.mubr.f32.mxu0 0.0
  %v353 = vand.u32 %v63, 4294901760
  %v354 = vsub.f32 %v63, %v353
  %355 = vmatmul.mubr.f32.gmra.mrb[0].mxu0 %v354
  %v356 = vpop.f32.mrb[0].mxu0
  %v357 = vadd.f32 %v263, %v356
  %v358 = vpop.f32.mrb[0].mxu0
  %359 = vmatprep.mubr.f32.mxu0 0.0
  %v360 = vand.u32 %v66, 4294901760
  %v361 = vsub.f32 %v66, %v360
  %362 = vmatmul.mubr.f32.gmra.mrb[0].mxu0 %v361
  %v363 = vpop.f32.mrb[0].mxu0
  %v364 = vadd.f32 %v269, %v363
  %v365 = vpop.f32.mrb[0].mxu0
  %366 = vdwg.mxu0
  %367 = vmatprep.subr.mxu0 0.0
  %v368 = vand.u32 %v70, 4294901760
  %369 = vmatpush1.msra.mxu0 %v368
  %370 = vmatprep.subr.mxu0 0.0
  %371 = vmatpush1.msra.mxu0 0.0
  %372 = vmatprep.subr.mxu0 0.0
  %373 = vmatpush1.msra.mxu0 0.0
  %374 = vmatprep.subr.mxu0 0.0
  %375 = vmatpush1.msra.mxu0 0.0
  %376 = vmatprep.subr.mxu0 0.0
  %377 = vmatpush1.msra.mxu0 0.0
  %378 = vmatprep.subr.mxu0 0.0
  %379 = vmatpush1.msra.mxu0 0.0
  %380 = vmatprep.subr.mxu0 0.0
  %381 = vmatpush1.msra.mxu0 0.0
  %382 = vmatprep.subr.mxu0 0.0
  %383 = vmatpush1.msra.mxu0 0.0
  %384 = vmatprep.subr.mxu0 0.0
  %385 = vmatpush1.msra.mxu0 0.0
  %386 = vmatprep.subr.mxu0 0.0
  %387 = vmatpush1.msra.mxu0 0.0
  %388 = vmatprep.subr.mxu0 0.0
  %389 = vmatpush1.msra.mxu0 0.0
  %390 = vmatprep.subr.mxu0 0.0
  %391 = vmatpush1.msra.mxu0 0.0
  %392 = vmatprep.subr.mxu0 0.0
  %393 = vmatpush1.msra.mxu0 0.0
  %394 = vmatprep.subr.mxu0 0.0
  %395 = vmatpush1.msra.mxu0 0.0
  %396 = vmatprep.subr.mxu0 0.0
  %397 = vmatpush1.msra.mxu0 0.0
  %398 = vmatprep.subr.mxu0 0.0
  %399 = vmatpush1.msra.mxu0 0.0
  %400 = vmatprep.subr.mxu0 0.0
  %401 = vmatpush1.msra.mxu0 0.0
  %402 = vmatprep.subr.mxu0 0.0
  %403 = vmatpush1.msra.mxu0 0.0
  %404 = vmatprep.subr.mxu0 0.0
  %405 = vmatpush1.msra.mxu0 0.0
  %406 = vmatprep.subr.mxu0 0.0
  %407 = vmatpush1.msra.mxu0 0.0
  %408 = vmatprep.subr.mxu0 0.0
  %409 = vmatpush1.msra.mxu0 0.0
  %410 = vmatprep.subr.mxu0 0.0
  %411 = vmatpush1.msra.mxu0 0.0
  %412 = vmatprep.subr.mxu0 0.0
  %413 = vmatpush1.msra.mxu0 0.0
  %414 = vmatprep.subr.mxu0 0.0
  %415 = vmatpush1.msra.mxu0 0.0
  %416 = vmatprep.subr.mxu0 0.0
  %417 = vmatpush1.msra.mxu0 0.0
  %418 = vmatprep.subr.mxu0 0.0
  %419 = vmatpush1.msra.mxu0 0.0
  %420 = vmatprep.subr.mxu0 0.0
  %421 = vmatpush1.msra.mxu0 0.0
  %422 = vmatprep.subr.mxu0 0.0
  %423 = vmatpush1.msra.mxu0 0.0
  %424 = vmatprep.subr.mxu0 0.0
  %425 = vmatpush1.msra.mxu0 0.0
  %426 = vmatprep.subr.mxu0 0.0
  %427 = vmatpush1.msra.mxu0 0.0
  %428 = vmatprep.subr.mxu0 0.0
  %429 = vmatpush1.msra.mxu0 0.0
  %430 = vmatprep.subr.mxu0 0.0
  %431 = vmatpush1.msra.mxu0 0.0
  %432 = vmatprep.mubr.f32.mxu0 0.0
  %v433 = vand.u32 %v57, 4294901760
  %v434 = vsub.f32 %v57, %v433
  %v435 = vand.u32 %v434, 4294901760
  %436 = vmatmul.mubr.f32.gmra.mrb[0].mxu0 %v435
  %v437 = vpop.f32.mrb[0].mxu0
  %v438 = vadd.f32 %v343, %v437
  %v439 = vpop.f32.mrb[0].mxu0
  %440 = vmatprep.mubr.f32.mxu0 0.0
  %v441 = vand.u32 %v60, 4294901760
  %v442 = vsub.f32 %v60, %v441
  %v443 = vand.u32 %v442, 4294901760
  %444 = vmatmul.mubr.f32.gmra.mrb[0].mxu0 %v443
  %v445 = vpop.f32.mrb[0].mxu0
  %v446 = vadd.f32 %v350, %v445
  %v447 = vpop.f32.mrb[0].mxu0
  %448 = vmatprep.mubr.f32.mxu0 0.0
  %v449 = vand.u32 %v63, 4294901760
  %v450 = vsub.f32 %v63, %v449
  %v451 = vand.u32 %v450, 4294901760
  %452 = vmatmul.mubr.f32.gmra.mrb[0].mxu0 %v451
  %v453 = vpop.f32.mrb[0].mxu0
  %v454 = vadd.f32 %v357, %v453
  %v455 = vpop.f32.mrb[0].mxu0
  %456 = vmatprep.mubr.f32.mxu0 0.0
  %v457 = vand.u32 %v66, 4294901760
  %v458 = vsub.f32 %v66, %v457
  %v459 = vand.u32 %v458, 4294901760
  %460 = vmatmul.mubr.f32.gmra.mrb[0].mxu0 %v459
  %v461 = vpop.f32.mrb[0].mxu0
  %v462 = vadd.f32 %v364, %v461
  %v463 = vpop.f32.mrb[0].mxu0
  %464 = vdwg.mxu0
  %465 = vmatprep.subr.mxu0 0.0
  %v466 = vand.u32 %v70, 4294901760
  %v467 = vsub.f32 %v70, %v466
  %v468 = vand.u32 %v467, 4294901760
  %469 = vmatpush1.msra.mxu0 %v468
  %470 = vmatprep.subr.mxu0 0.0
  %471 = vmatpush1.msra.mxu0 0.0
  %472 = vmatprep.subr.mxu0 0.0
  %473 = vmatpush1.msra.mxu0 0.0
  %474 = vmatprep.subr.mxu0 0.0
  %475 = vmatpush1.msra.mxu0 0.0
  %476 = vmatprep.subr.mxu0 0.0
  %477 = vmatpush1.msra.mxu0 0.0
  %478 = vmatprep.subr.mxu0 0.0
  %479 = vmatpush1.msra.mxu0 0.0
  %480 = vmatprep.subr.mxu0 0.0
  %481 = vmatpush1.msra.mxu0 0.0
  %482 = vmatprep.subr.mxu0 0.0
  %483 = vmatpush1.msra.mxu0 0.0
  %484 = vmatprep.subr.mxu0 0.0
  %485 = vmatpush1.msra.mxu0 0.0
  %486 = vmatprep.subr.mxu0 0.0
  %487 = vmatpush1.msra.mxu0 0.0
  %488 = vmatprep.subr.mxu0 0.0
  %489 = vmatpush1.msra.mxu0 0.0
  %490 = vmatprep.subr.mxu0 0.0
  %491 = vmatpush1.msra.mxu0 0.0
  %492 = vmatprep.subr.mxu0 0.0
  %493 = vmatpush1.msra.mxu0 0.0
  %494 = vmatprep.subr.mxu0 0.0
  %495 = vmatpush1.msra.mxu0 0.0
  %496 = vmatprep.subr.mxu0 0.0
  %497 = vmatpush1.msra.mxu0 0.0
  %498 = vmatprep.subr.mxu0 0.0
  %499 = vmatpush1.msra.mxu0 0.0
  %500 = vmatprep.subr.mxu0 0.0
  %501 = vmatpush1.msra.mxu0 0.0
  %502 = vmatprep.subr.mxu0 0.0
  %503 = vmatpush1.msra.mxu0 0.0
  %504 = vmatprep.subr.mxu0 0.0
  %505 = vmatpush1.msra.mxu0 0.0
  %506 = vmatprep.subr.mxu0 0.0
  %507 = vmatpush1.msra.mxu0 0.0
  %508 = vmatprep.subr.mxu0 0.0
  %509 = vmatpush1.msra.mxu0 0.0
  %510 = vmatprep.subr.mxu0 0.0
  %511 = vmatpush1.msra.mxu0 0.0
  %512 = vmatprep.subr.mxu0 0.0
  %513 = vmatpush1.msra.mxu0 0.0
  %514 = vmatprep.subr.mxu0 0.0
  %515 = vmatpush1.msra.mxu0 0.0
  %516 = vmatprep.subr.mxu0 0.0
  %517 = vmatpush1.msra.mxu0 0.0
  %518 = vmatprep.subr.mxu0 0.0
  %519 = vmatpush1.msra.mxu0 0.0
  %520 = vmatprep.subr.mxu0 0.0
  %521 = vmatpush1.msra.mxu0 0.0
  %522 = vmatprep.subr.mxu0 0.0
  %523 = vmatpush1.msra.mxu0 0.0
  %524 = vmatprep.subr.mxu0 0.0
  %525 = vmatpush1.msra.mxu0 0.0
  %526 = vmatprep.subr.mxu0 0.0
  %527 = vmatpush1.msra.mxu0 0.0
  %528 = vmatprep.subr.mxu0 0.0
  %529 = vmatpush1.msra.mxu0 0.0
  %530 = vmatprep.subr.mxu0 0.0
  %531 = vmatpush1.msra.mxu0 0.0
  %532 = vmatprep.mubr.f32.mxu0 0.0
  %v533 = vand.u32 %v57, 4294901760
  %534 = vmatmul.mubr.f32.gmra.mrb[0].mxu0 %v533
  %v535 = vpop.f32.mrb[0].mxu0
  %v536 = vadd.f32 %v438, %v535
  %v537 = vpop.f32.mrb[0].mxu0
  %538 = vmatprep.mubr.f32.mxu0 0.0
  %v539 = vand.u32 %v60, 4294901760
  %540 = vmatmul.mubr.f32.gmra.mrb[0].mxu0 %v539
  %v541 = vpop.f32.mrb[0].mxu0
  %v542 = vadd.f32 %v446, %v541
  %v543 = vpop.f32.mrb[0].mxu0
  %544 = vmatprep.mubr.f32.mxu0 0.0
  %v545 = vand.u32 %v63, 4294901760
  %546 = vmatmul.mubr.f32.gmra.mrb[0].mxu0 %v545
  %v547 = vpop.f32.mrb[0].mxu0
  %v548 = vadd.f32 %v454, %v547
  %v549 = vpop.f32.mrb[0].mxu0
  %550 = vmatprep.mubr.f32.mxu0 0.0
  %v551 = vand.u32 %v66, 4294901760
  %552 = vmatmul.mubr.f32.gmra.mrb[0].mxu0 %v551
  %v553 = vpop.f32.mrb[0].mxu0
  %v554 = vadd.f32 %v462, %v553
  %v555 = vpop.f32.mrb[0].mxu0
  %556 = vdwg.mxu0
  %557 = vmatprep.subr.mxu0 0.0
  %v558 = vand.u32 %v70, 4294901760
  %559 = vmatpush1.msra.mxu0 %v558
  %560 = vmatprep.subr.mxu0 0.0
  %561 = vmatpush1.msra.mxu0 0.0
  %562 = vmatprep.subr.mxu0 0.0
  %563 = vmatpush1.msra.mxu0 0.0
  %564 = vmatprep.subr.mxu0 0.0
  %565 = vmatpush1.msra.mxu0 0.0
  %566 = vmatprep.subr.mxu0 0.0
  %567 = vmatpush1.msra.mxu0 0.0
  %568 = vmatprep.subr.mxu0 0.0
  %569 = vmatpush1.msra.mxu0 0.0
  %570 = vmatprep.subr.mxu0 0.0
  %571 = vmatpush1.msra.mxu0 0.0
  %572 = vmatprep.subr.mxu0 0.0
  %573 = vmatpush1.msra.mxu0 0.0
  %574 = vmatprep.subr.mxu0 0.0
  %575 = vmatpush1.msra.mxu0 0.0
  %576 = vmatprep.subr.mxu0 0.0
  %577 = vmatpush1.msra.mxu0 0.0
  %578 = vmatprep.subr.mxu0 0.0
  %579 = vmatpush1.msra.mxu0 0.0
  %580 = vmatprep.subr.mxu0 0.0
  %581 = vmatpush1.msra.mxu0 0.0
  %582 = vmatprep.subr.mxu0 0.0
  %583 = vmatpush1.msra.mxu0 0.0
  %584 = vmatprep.subr.mxu0 0.0
  %585 = vmatpush1.msra.mxu0 0.0
  %586 = vmatprep.subr.mxu0 0.0
  %587 = vmatpush1.msra.mxu0 0.0
  %588 = vmatprep.subr.mxu0 0.0
  %589 = vmatpush1.msra.mxu0 0.0
  %590 = vmatprep.subr.mxu0 0.0
  %591 = vmatpush1.msra.mxu0 0.0
  %592 = vmatprep.subr.mxu0 0.0
  %593 = vmatpush1.msra.mxu0 0.0
  %594 = vmatprep.subr.mxu0 0.0
  %595 = vmatpush1.msra.mxu0 0.0
  %596 = vmatprep.subr.mxu0 0.0
  %597 = vmatpush1.msra.mxu0 0.0
  %598 = vmatprep.subr.mxu0 0.0
  %599 = vmatpush1.msra.mxu0 0.0
  %600 = vmatprep.subr.mxu0 0.0
  %601 = vmatpush1.msra.mxu0 0.0
  %602 = vmatprep.subr.mxu0 0.0
  %603 = vmatpush1.msra.mxu0 0.0
  %604 = vmatprep.subr.mxu0 0.0
  %605 = vmatpush1.msra.mxu0 0.0
  %606 = vmatprep.subr.mxu0 0.0
  %607 = vmatpush1.msra.mxu0 0.0
  %608 = vmatprep.subr.mxu0 0.0
  %609 = vmatpush1.msra.mxu0 0.0
  %610 = vmatprep.subr.mxu0 0.0
  %611 = vmatpush1.msra.mxu0 0.0
  %612 = vmatprep.subr.mxu0 0.0
  %613 = vmatpush1.msra.mxu0 0.0
  %614 = vmatprep.subr.mxu0 0.0
  %615 = vmatpush1.msra.mxu0 0.0
  %616 = vmatprep.subr.mxu0 0.0
  %617 = vmatpush1.msra.mxu0 0.0
  %618 = vmatprep.subr.mxu0 0.0
  %619 = vmatpush1.msra.mxu0 0.0
  %620 = vmatprep.subr.mxu0 0.0
  %621 = vmatpush1.msra.mxu0 0.0
  %622 = vmatprep.mubr.f32.mxu0 0.0
  %v623 = vand.u32 %v57, 4294901760
  %624 = vmatmul.mubr.f32.gmra.mrb[0].mxu0 %v623
  %v625 = vpop.f32.mrb[0].mxu0
  %v626 = vadd.f32 %v536, %v625
  %v627 = vpop.f32.mrb[0].mxu0
  %628 = vmatprep.mubr.f32.mxu0 0.0
  %v629 = vand.u32 %v60, 4294901760
  %630 = vmatmul.mubr.f32.gmra.mrb[0].mxu0 %v629
  %v631 = vpop.f32.mrb[0].mxu0
  %v632 = vadd.f32 %v542, %v631
  %v633 = vpop.f32.mrb[0].mxu0
  %634 = vmatprep.mubr.f32.mxu0 0.0
  %v635 = vand.u32 %v63, 4294901760
  %636 = vmatmul.mubr.f32.gmra.mrb[0].mxu0 %v635
  %v637 = vpop.f32.mrb[0].mxu0
  %v638 = vadd.f32 %v548, %v637
  %v639 = vpop.f32.mrb[0].mxu0
  %640 = vmatprep.mubr.f32.mxu0 0.0
  %v641 = vand.u32 %v66, 4294901760
  %642 = vmatmul.mubr.f32.gmra.mrb[0].mxu0 %v641
  %v643 = vpop.f32.mrb[0].mxu0
  %v644 = vadd.f32 %v554, %v643
  %v645 = vpop.f32.mrb[0].mxu0
  %646 = vdwg.mxu0
  %v647 = vtanh.pop %v626
  %v648 = vtanh.pop %v632
  %v649 = vtanh.pop %v638
  %v650 = vtanh.pop %v644
  %v651 = vld [vmem:[%s3] sm:$0xff]
  %v652 = vld [vmem:[%s3 + $0x8] sm:$0xff]
  %v653 = vld [vmem:[%s3 + $0x10] sm:$0xff]
  %v654 = vld [vmem:[%s3 + $0x18] sm:$0xff]
  %v655 = vld [vmem:[%s4] sm:$0xff]
  %v656 = vld [vmem:[%s4 + $0x8] sm:$0xff]
  %v657 = vld [vmem:[%s4 + $0x10] sm:$0xff]
  %v658 = vld [vmem:[%s4 + $0x18] sm:$0xff]
  %660 = vset.pattern.permute.xlu0 0
  %661 = vperm.xlu0 %660, %v655
  %v662 = vpop.permute.xlu0 %661
  %665 = vset.pattern.permute.xlu0 0
  %666 = vperm.xlu0 %665, %v656
  %v667 = vpop.permute.xlu0 %666
  %670 = vset.pattern.permute.xlu0 0
  %671 = vperm.xlu0 %670, %v657
  %v672 = vpop.permute.xlu0 %671
  %675 = vset.pattern.permute.xlu0 0
  %676 = vperm.xlu0 %675, %v658
  %v677 = vpop.permute.xlu0 %676
  %vm679 = vcmask 261120
  %v681 = vsel %vm679, %v651, 0
  %v684 = vsel %vm679, %v652, 0
  %v687 = vsel %vm679, %v653, 0
  %v690 = vsel %vm679, %v654, 0
  %692 = vmatprep.subr.mxu0 0.0
  %v693 = vand.u32 %v647, 4294901760
  %694 = vmatpush1.msra.mxu0 %v693
  %695 = vmatprep.subr.mxu0 0.0
  %v696 = vand.u32 %v648, 4294901760
  %697 = vmatpush1.msra.mxu0 %v696
  %698 = vmatprep.subr.mxu0 0.0
  %v699 = vand.u32 %v649, 4294901760
  %700 = vmatpush1.msra.mxu0 %v699
  %701 = vmatprep.subr.mxu0 0.0
  %v702 = vand.u32 %v650, 4294901760
  %703 = vmatpush1.msra.mxu0 %v702
  %704 = vmatprep.subr.mxu0 0.0
  %705 = vmatpush1.msra.mxu0 0.0
  %706 = vmatprep.subr.mxu0 0.0
  %707 = vmatpush1.msra.mxu0 0.0
  %708 = vmatprep.subr.mxu0 0.0
  %709 = vmatpush1.msra.mxu0 0.0
  %710 = vmatprep.subr.mxu0 0.0
  %711 = vmatpush1.msra.mxu0 0.0
  %712 = vmatprep.subr.mxu0 0.0
  %713 = vmatpush1.msra.mxu0 0.0
  %714 = vmatprep.subr.mxu0 0.0
  %715 = vmatpush1.msra.mxu0 0.0
  %716 = vmatprep.subr.mxu0 0.0
  %717 = vmatpush1.msra.mxu0 0.0
  %718 = vmatprep.subr.mxu0 0.0
  %719 = vmatpush1.msra.mxu0 0.0
  %720 = vmatprep.subr.mxu0 0.0
  %721 = vmatpush1.msra.mxu0 0.0
  %722 = vmatprep.subr.mxu0 0.0
  %723 = vmatpush1.msra.mxu0 0.0
  %724 = vmatprep.subr.mxu0 0.0
  %725 = vmatpush1.msra.mxu0 0.0
  %726 = vmatprep.subr.mxu0 0.0
  %727 = vmatpush1.msra.mxu0 0.0
  %728 = vmatprep.subr.mxu0 0.0
  %729 = vmatpush1.msra.mxu0 0.0
  %730 = vmatprep.subr.mxu0 0.0
  %731 = vmatpush1.msra.mxu0 0.0
  %732 = vmatprep.subr.mxu0 0.0
  %733 = vmatpush1.msra.mxu0 0.0
  %734 = vmatprep.subr.mxu0 0.0
  %735 = vmatpush1.msra.mxu0 0.0
  %736 = vmatprep.subr.mxu0 0.0
  %737 = vmatpush1.msra.mxu0 0.0
  %738 = vmatprep.subr.mxu0 0.0
  %739 = vmatpush1.msra.mxu0 0.0
  %740 = vmatprep.subr.mxu0 0.0
  %741 = vmatpush1.msra.mxu0 0.0
  %742 = vmatprep.subr.mxu0 0.0
  %743 = vmatpush1.msra.mxu0 0.0
  %744 = vmatprep.subr.mxu0 0.0
  %745 = vmatpush1.msra.mxu0 0.0
  %746 = vmatprep.subr.mxu0 0.0
  %747 = vmatpush1.msra.mxu0 0.0
  %748 = vmatprep.subr.mxu0 0.0
  %749 = vmatpush1.msra.mxu0 0.0
  %750 = vmatprep.subr.mxu0 0.0
  %751 = vmatpush1.msra.mxu0 0.0
  %752 = vmatprep.subr.mxu0 0.0
  %753 = vmatpush1.msra.mxu0 0.0
  %754 = vmatprep.subr.mxu0 0.0
  %755 = vmatpush1.msra.mxu0 0.0
  %756 = vmatprep.subr.mxu0 0.0
  %757 = vmatpush1.msra.mxu0 0.0
  %758 = vmatprep.subr.mxu0 0.0
  %759 = vmatpush1.msra.mxu0 0.0
  %760 = vmatprep.mubr.f32.mxu0 0.0
  %v761 = vand.u32 %v681, 4294901760
  %v762 = vsub.f32 %v681, %v761
  %v763 = vand.u32 %v762, 4294901760
  %v764 = vsub.f32 %v762, %v763
  %v765 = vand.u32 %v764, 4294901760
  %766 = vmatmul.mubr.f32.gmra.mrb[0].mxu0 %v765
  %v767 = vpop.f32.mrb[0].mxu0
  %v768 = vadd.f32 %v662, %v767
  %v769 = vpop.f32.mrb[0].mxu0
  %770 = vmatprep.mubr.f32.mxu0 0.0
  %v771 = vand.u32 %v684, 4294901760
  %v772 = vsub.f32 %v684, %v771
  %v773 = vand.u32 %v772, 4294901760
  %v774 = vsub.f32 %v772, %v773
  %v775 = vand.u32 %v774, 4294901760
  %776 = vmatmul.mubr.f32.gmra.mrb[0].mxu0 %v775
  %v777 = vpop.f32.mrb[0].mxu0
  %v778 = vadd.f32 %v667, %v777
  %v779 = vpop.f32.mrb[0].mxu0
  %780 = vmatprep.mubr.f32.mxu0 0.0
  %v781 = vand.u32 %v687, 4294901760
  %v782 = vsub.f32 %v687, %v781
  %v783 = vand.u32 %v782, 4294901760
  %v784 = vsub.f32 %v782, %v783
  %v785 = vand.u32 %v784, 4294901760
  %786 = vmatmul.mubr.f32.gmra.mrb[0].mxu0 %v785
  %v787 = vpop.f32.mrb[0].mxu0
  %v788 = vadd.f32 %v672, %v787
  %v789 = vpop.f32.mrb[0].mxu0
  %790 = vmatprep.mubr.f32.mxu0 0.0
  %v791 = vand.u32 %v690, 4294901760
  %v792 = vsub.f32 %v690, %v791
  %v793 = vand.u32 %v792, 4294901760
  %v794 = vsub.f32 %v792, %v793
  %v795 = vand.u32 %v794, 4294901760
  %796 = vmatmul.mubr.f32.gmra.mrb[0].mxu0 %v795
  %v797 = vpop.f32.mrb[0].mxu0
  %v798 = vadd.f32 %v677, %v797
  %v799 = vpop.f32.mrb[0].mxu0
  %800 = vdwg.mxu0
  %801 = vmatprep.subr.mxu0 0.0
  %v802 = vand.u32 %v647, 4294901760
  %v803 = vsub.f32 %v647, %v802
  %v804 = vand.u32 %v803, 4294901760
  %v805 = vsub.f32 %v803, %v804
  %v806 = vand.u32 %v805, 4294901760
  %807 = vmatpush1.msra.mxu0 %v806
  %808 = vmatprep.subr.mxu0 0.0
  %v809 = vand.u32 %v648, 4294901760
  %v810 = vsub.f32 %v648, %v809
  %v811 = vand.u32 %v810, 4294901760
  %v812 = vsub.f32 %v810, %v811
  %v813 = vand.u32 %v812, 4294901760
  %814 = vmatpush1.msra.mxu0 %v813
  %815 = vmatprep.subr.mxu0 0.0
  %v816 = vand.u32 %v649, 4294901760
  %v817 = vsub.f32 %v649, %v816
  %v818 = vand.u32 %v817, 4294901760
  %v819 = vsub.f32 %v817, %v818
  %v820 = vand.u32 %v819, 4294901760
  %821 = vmatpush1.msra.mxu0 %v820
  %822 = vmatprep.subr.mxu0 0.0
  %v823 = vand.u32 %v650, 4294901760
  %v824 = vsub.f32 %v650, %v823
  %v825 = vand.u32 %v824, 4294901760
  %v826 = vsub.f32 %v824, %v825
  %v827 = vand.u32 %v826, 4294901760
  %828 = vmatpush1.msra.mxu0 %v827
  %829 = vmatprep.subr.mxu0 0.0
  %830 = vmatpush1.msra.mxu0 0.0
  %831 = vmatprep.subr.mxu0 0.0
  %832 = vmatpush1.msra.mxu0 0.0
  %833 = vmatprep.subr.mxu0 0.0
  %834 = vmatpush1.msra.mxu0 0.0
  %835 = vmatprep.subr.mxu0 0.0
  %836 = vmatpush1.msra.mxu0 0.0
  %837 = vmatprep.subr.mxu0 0.0
  %838 = vmatpush1.msra.mxu0 0.0
  %839 = vmatprep.subr.mxu0 0.0
  %840 = vmatpush1.msra.mxu0 0.0
  %841 = vmatprep.subr.mxu0 0.0
  %842 = vmatpush1.msra.mxu0 0.0
  %843 = vmatprep.subr.mxu0 0.0
  %844 = vmatpush1.msra.mxu0 0.0
  %845 = vmatprep.subr.mxu0 0.0
  %846 = vmatpush1.msra.mxu0 0.0
  %847 = vmatprep.subr.mxu0 0.0
  %848 = vmatpush1.msra.mxu0 0.0
  %849 = vmatprep.subr.mxu0 0.0
  %850 = vmatpush1.msra.mxu0 0.0
  %851 = vmatprep.subr.mxu0 0.0
  %852 = vmatpush1.msra.mxu0 0.0
  %853 = vmatprep.subr.mxu0 0.0
  %854 = vmatpush1.msra.mxu0 0.0
  %855 = vmatprep.subr.mxu0 0.0
  %856 = vmatpush1.msra.mxu0 0.0
  %857 = vmatprep.subr.mxu0 0.0
  %858 = vmatpush1.msra.mxu0 0.0
  %859 = vmatprep.subr.mxu0 0.0
  %860 = vmatpush1.msra.mxu0 0.0
  %861 = vmatprep.subr.mxu0 0.0
  %862 = vmatpush1.msra.mxu0 0.0
  %863 = vmatprep.subr.mxu0 0.0
  %864 = vmatpush1.msra.mxu0 0.0
  %865 = vmatprep.subr.mxu0 0.0
  %866 = vmatpush1.msra.mxu0 0.0
  %867 = vmatprep.subr.mxu0 0.0
  %868 = vmatpush1.msra.mxu0 0.0
  %869 = vmatprep.subr.mxu0 0.0
  %870 = vmatpush1.msra.mxu0 0.0
  %871 = vmatprep.subr.mxu0 0.0
  %872 = vmatpush1.msra.mxu0 0.0
  %873 = vmatprep.subr.mxu0 0.0
  %874 = vmatpush1.msra.mxu0 0.0
  %875 = vmatprep.subr.mxu0 0.0
  %876 = vmatpush1.msra.mxu0 0.0
  %877 = vmatprep.subr.mxu0 0.0
  %878 = vmatpush1.msra.mxu0 0.0
  %879 = vmatprep.subr.mxu0 0.0
  %880 = vmatpush1.msra.mxu0 0.0
  %881 = vmatprep.subr.mxu0 0.0
  %882 = vmatpush1.msra.mxu0 0.0
  %883 = vmatprep.subr.mxu0 0.0
  %884 = vmatpush1.msra.mxu0 0.0
  %885 = vmatprep.mubr.f32.mxu0 0.0
  %v886 = vand.u32 %v681, 4294901760
  %887 = vmatmul.mubr.f32.gmra.mrb[0].mxu0 %v886
  %v888 = vpop.f32.mrb[0].mxu0
  %v889 = vadd.f32 %v768, %v888
  %v890 = vpop.f32.mrb[0].mxu0
  %891 = vmatprep.mubr.f32.mxu0 0.0
  %v892 = vand.u32 %v684, 4294901760
  %893 = vmatmul.mubr.f32.gmra.mrb[0].mxu0 %v892
  %v894 = vpop.f32.mrb[0].mxu0
  %v895 = vadd.f32 %v778, %v894
  %v896 = vpop.f32.mrb[0].mxu0
  %897 = vmatprep.mubr.f32.mxu0 0.0
  %v898 = vand.u32 %v687, 4294901760
  %899 = vmatmul.mubr.f32.gmra.mrb[0].mxu0 %v898
  %v900 = vpop.f32.mrb[0].mxu0
  %v901 = vadd.f32 %v788, %v900
  %v902 = vpop.f32.mrb[0].mxu0
  %903 = vmatprep.mubr.f32.mxu0 0.0
  %v904 = vand.u32 %v690, 4294901760
  %905 = vmatmul.mubr.f32.gmra.mrb[0].mxu0 %v904
  %v906 = vpop.f32.mrb[0].mxu0
  %v907 = vadd.f32 %v798, %v906
  %v908 = vpop.f32.mrb[0].mxu0
  %909 = vdwg.mxu0
  %910 = vmatprep.subr.mxu0 0.0
  %v911 = vand.u32 %v647, 4294901760
  %v912 = vsub.f32 %v647, %v911
  %913 = vmatpush1.msra.mxu0 %v912
  %914 = vmatprep.subr.mxu0 0.0
  %v915 = vand.u32 %v648, 4294901760
  %v916 = vsub.f32 %v648, %v915
  %917 = vmatpush1.msra.mxu0 %v916
  %918 = vmatprep.subr.mxu0 0.0
  %v919 = vand.u32 %v649, 4294901760
  %v920 = vsub.f32 %v649, %v919
  %921 = vmatpush1.msra.mxu0 %v920
  %922 = vmatprep.subr.mxu0 0.0
  %v923 = vand.u32 %v650, 4294901760
  %v924 = vsub.f32 %v650, %v923
  %925 = vmatpush1.msra.mxu0 %v924
  %926 = vmatprep.subr.mxu0 0.0
  %927 = vmatpush1.msra.mxu0 0.0
  %928 = vmatprep.subr.mxu0 0.0
  %929 = vmatpush1.msra.mxu0 0.0
  %930 = vmatprep.subr.mxu0 0.0
  %931 = vmatpush1.msra.mxu0 0.0
  %932 = vmatprep.subr.mxu0 0.0
  %933 = vmatpush1.msra.mxu0 0.0
  %934 = vmatprep.subr.mxu0 0.0
  %935 = vmatpush1.msra.mxu0 0.0
  %936 = vmatprep.subr.mxu0 0.0
  %937 = vmatpush1.msra.mxu0 0.0
  %938 = vmatprep.subr.mxu0 0.0
  %939 = vmatpush1.msra.mxu0 0.0
  %940 = vmatprep.subr.mxu0 0.0
  %941 = vmatpush1.msra.mxu0 0.0
  %942 = vmatprep.subr.mxu0 0.0
  %943 = vmatpush1.msra.mxu0 0.0
  %944 = vmatprep.subr.mxu0 0.0
  %945 = vmatpush1.msra.mxu0 0.0
  %946 = vmatprep.subr.mxu0 0.0
  %947 = vmatpush1.msra.mxu0 0.0
  %948 = vmatprep.subr.mxu0 0.0
  %949 = vmatpush1.msra.mxu0 0.0
  %950 = vmatprep.subr.mxu0 0.0
  %951 = vmatpush1.msra.mxu0 0.0
  %952 = vmatprep.subr.mxu0 0.0
  %953 = vmatpush1.msra.mxu0 0.0
  %954 = vmatprep.subr.mxu0 0.0
  %955 = vmatpush1.msra.mxu0 0.0
  %956 = vmatprep.subr.mxu0 0.0
  %957 = vmatpush1.msra.mxu0 0.0
  %958 = vmatprep.subr.mxu0 0.0
  %959 = vmatpush1.msra.mxu0 0.0
  %960 = vmatprep.subr.mxu0 0.0
  %961 = vmatpush1.msra.mxu0 0.0
  %962 = vmatprep.subr.mxu0 0.0
  %963 = vmatpush1.msra.mxu0 0.0
  %964 = vmatprep.subr.mxu0 0.0
  %965 = vmatpush1.msra.mxu0 0.0
  %966 = vmatprep.subr.mxu0 0.0
  %967 = vmatpush1.msra.mxu0 0.0
  %968 = vmatprep.subr.mxu0 0.0
  %969 = vmatpush1.msra.mxu0 0.0
  %970 = vmatprep.subr.mxu0 0.0
  %971 = vmatpush1.msra.mxu0 0.0
  %972 = vmatprep.subr.mxu0 0.0
  %973 = vmatpush1.msra.mxu0 0.0
  %974 = vmatprep.subr.mxu0 0.0
  %975 = vmatpush1.msra.mxu0 0.0
  %976 = vmatprep.subr.mxu0 0.0
  %977 = vmatpush1.msra.mxu0 0.0
  %978 = vmatprep.subr.mxu0 0.0
  %979 = vmatpush1.msra.mxu0 0.0
  %980 = vmatprep.subr.mxu0 0.0
  %981 = vmatpush1.msra.mxu0 0.0
  %982 = vmatprep.mubr.f32.mxu0 0.0
  %v983 = vand.u32 %v681, 4294901760
  %v984 = vsub.f32 %v681, %v983
  %985 = vmatmul.mubr.f32.gmra.mrb[0].mxu0 %v984
  %v986 = vpop.f32.mrb[0].mxu0
  %v987 = vadd.f32 %v889, %v986
  %v988 = vpop.f32.mrb[0].mxu0
  %989 = vmatprep.mubr.f32.mxu0 0.0
  %v990 = vand.u32 %v684, 4294901760
  %v991 = vsub.f32 %v684, %v990
  %992 = vmatmul.mubr.f32.gmra.mrb[0].mxu0 %v991
  %v993 = vpop.f32.mrb[0].mxu0
  %v994 = vadd.f32 %v895, %v993
  %v995 = vpop.f32.mrb[0].mxu0
  %996 = vmatprep.mubr.f32.mxu0 0.0
  %v997 = vand.u32 %v687, 4294901760
  %v998 = vsub.f32 %v687, %v997
  %999 = vmatmul.mubr.f32.gmra.mrb[0].mxu0 %v998
  %v1000 = vpop.f32.mrb[0].mxu0
  %v1001 = vadd.f32 %v901, %v1000
  %v1002 = vpop.f32.mrb[0].mxu0
  %1003 = vmatprep.mubr.f32.mxu0 0.0
  %v1004 = vand.u32 %v690, 4294901760
  %v1005 = vsub.f32 %v690, %v1004
  %1006 = vmatmul.mubr.f32.gmra.mrb[0].mxu0 %v1005
  %v1007 = vpop.f32.mrb[0].mxu0
  %v1008 = vadd.f32 %v907, %v1007
  %v1009 = vpop.f32.mrb[0].mxu0
  %1010 = vdwg.mxu0
  %1011 = vmatprep.subr.mxu0 0.0
  %v1012 = vand.u32 %v647, 4294901760
  %1013 = vmatpush1.msra.mxu0 %v1012
  %1014 = vmatprep.subr.mxu0 0.0
  %v1015 = vand.u32 %v648, 4294901760
  %1016 = vmatpush1.msra.mxu0 %v1015
  %1017 = vmatprep.subr.mxu0 0.0
  %v1018 = vand.u32 %v649, 4294901760
  %1019 = vmatpush1.msra.mxu0 %v1018
  %1020 = vmatprep.subr.mxu0 0.0
  %v1021 = vand.u32 %v650, 4294901760
  %1022 = vmatpush1.msra.mxu0 %v1021
  %1023 = vmatprep.subr.mxu0 0.0
  %1024 = vmatpush1.msra.mxu0 0.0
  %1025 = vmatprep.subr.mxu0 0.0
  %1026 = vmatpush1.msra.mxu0 0.0
  %1027 = vmatprep.subr.mxu0 0.0
  %1028 = vmatpush1.msra.mxu0 0.0
  %1029 = vmatprep.subr.mxu0 0.0
  %1030 = vmatpush1.msra.mxu0 0.0
  %1031 = vmatprep.subr.mxu0 0.0
  %1032 = vmatpush1.msra.mxu0 0.0
  %1033 = vmatprep.subr.mxu0 0.0
  %1034 = vmatpush1.msra.mxu0 0.0
  %1035 = vmatprep.subr.mxu0 0.0
  %1036 = vmatpush1.msra.mxu0 0.0
  %1037 = vmatprep.subr.mxu0 0.0
  %1038 = vmatpush1.msra.mxu0 0.0
  %1039 = vmatprep.subr.mxu0 0.0
  %1040 = vmatpush1.msra.mxu0 0.0
  %1041 = vmatprep.subr.mxu0 0.0
  %1042 = vmatpush1.msra.mxu0 0.0
  %1043 = vmatprep.subr.mxu0 0.0
  %1044 = vmatpush1.msra.mxu0 0.0
  %1045 = vmatprep.subr.mxu0 0.0
  %1046 = vmatpush1.msra.mxu0 0.0
  %1047 = vmatprep.subr.mxu0 0.0
  %1048 = vmatpush1.msra.mxu0 0.0
  %1049 = vmatprep.subr.mxu0 0.0
  %1050 = vmatpush1.msra.mxu0 0.0
  %1051 = vmatprep.subr.mxu0 0.0
  %1052 = vmatpush1.msra.mxu0 0.0
  %1053 = vmatprep.subr.mxu0 0.0
  %1054 = vmatpush1.msra.mxu0 0.0
  %1055 = vmatprep.subr.mxu0 0.0
  %1056 = vmatpush1.msra.mxu0 0.0
  %1057 = vmatprep.subr.mxu0 0.0
  %1058 = vmatpush1.msra.mxu0 0.0
  %1059 = vmatprep.subr.mxu0 0.0
  %1060 = vmatpush1.msra.mxu0 0.0
  %1061 = vmatprep.subr.mxu0 0.0
  %1062 = vmatpush1.msra.mxu0 0.0
  %1063 = vmatprep.subr.mxu0 0.0
  %1064 = vmatpush1.msra.mxu0 0.0
  %1065 = vmatprep.subr.mxu0 0.0
  %1066 = vmatpush1.msra.mxu0 0.0
  %1067 = vmatprep.subr.mxu0 0.0
  %1068 = vmatpush1.msra.mxu0 0.0
  %1069 = vmatprep.subr.mxu0 0.0
  %1070 = vmatpush1.msra.mxu0 0.0
  %1071 = vmatprep.subr.mxu0 0.0
  %1072 = vmatpush1.msra.mxu0 0.0
  %1073 = vmatprep.subr.mxu0 0.0
  %1074 = vmatpush1.msra.mxu0 0.0
  %1075 = vmatprep.subr.mxu0 0.0
  %1076 = vmatpush1.msra.mxu0 0.0
  %1077 = vmatprep.subr.mxu0 0.0
  %1078 = vmatpush1.msra.mxu0 0.0
  %1079 = vmatprep.mubr.f32.mxu0 0.0
  %v1080 = vand.u32 %v681, 4294901760
  %v1081 = vsub.f32 %v681, %v1080
  %v1082 = vand.u32 %v1081, 4294901760
  %1083 = vmatmul.mubr.f32.gmra.mrb[0].mxu0 %v1082
  %v1084 = vpop.f32.mrb[0].mxu0
  %v1085 = vadd.f32 %v987, %v1084
  %v1086 = vpop.f32.mrb[0].mxu0
  %1087 = vmatprep.mubr.f32.mxu0 0.0
  %v1088 = vand.u32 %v684, 4294901760
  %v1089 = vsub.f32 %v684, %v1088
  %v1090 = vand.u32 %v1089, 4294901760
  %1091 = vmatmul.mubr.f32.gmra.mrb[0].mxu0 %v1090
  %v1092 = vpop.f32.mrb[0].mxu0
  %v1093 = vadd.f32 %v994, %v1092
  %v1094 = vpop.f32.mrb[0].mxu0
  %1095 = vmatprep.mubr.f32.mxu0 0.0
  %v1096 = vand.u32 %v687, 4294901760
  %v1097 = vsub.f32 %v687, %v1096
  %v1098 = vand.u32 %v1097, 4294901760
  %1099 = vmatmul.mubr.f32.gmra.mrb[0].mxu0 %v1098
  %v1100 = vpop.f32.mrb[0].mxu0
  %v1101 = vadd.f32 %v1001, %v1100
  %v1102 = vpop.f32.mrb[0].mxu0
  %1103 = vmatprep.mubr.f32.mxu0 0.0
  %v1104 = vand.u32 %v690, 4294901760
  %v1105 = vsub.f32 %v690, %v1104
  %v1106 = vand.u32 %v1105, 4294901760
  %1107 = vmatmul.mubr.f32.gmra.mrb[0].mxu0 %v1106
  %v1108 = vpop.f32.mrb[0].mxu0
  %v1109 = vadd.f32 %v1008, %v1108
  %v1110 = vpop.f32.mrb[0].mxu0
  %1111 = vdwg.mxu0
  %1112 = vmatprep.subr.mxu0 0.0
  %v1113 = vand.u32 %v647, 4294901760
  %v1114 = vsub.f32 %v647, %v1113
  %v1115 = vand.u32 %v1114, 4294901760
  %1116 = vmatpush1.msra.mxu0 %v1115
  %1117 = vmatprep.subr.mxu0 0.0
  %v1118 = vand.u32 %v648, 4294901760
  %v1119 = vsub.f32 %v648, %v1118
  %v1120 = vand.u32 %v1119, 4294901760
  %1121 = vmatpush1.msra.mxu0 %v1120
  %1122 = vmatprep.subr.mxu0 0.0
  %v1123 = vand.u32 %v649, 4294901760
  %v1124 = vsub.f32 %v649, %v1123
  %v1125 = vand.u32 %v1124, 4294901760
  %1126 = vmatpush1.msra.mxu0 %v1125
  %1127 = vmatprep.subr.mxu0 0.0
  %v1128 = vand.u32 %v650, 4294901760
  %v1129 = vsub.f32 %v650, %v1128
  %v1130 = vand.u32 %v1129, 4294901760
  %1131 = vmatpush1.msra.mxu0 %v1130
  %1132 = vmatprep.subr.mxu0 0.0
  %1133 = vmatpush1.msra.mxu0 0.0
  %1134 = vmatprep.subr.mxu0 0.0
  %1135 = vmatpush1.msra.mxu0 0.0
  %1136 = vmatprep.subr.mxu0 0.0
  %1137 = vmatpush1.msra.mxu0 0.0
  %1138 = vmatprep.subr.mxu0 0.0
  %1139 = vmatpush1.msra.mxu0 0.0
  %1140 = vmatprep.subr.mxu0 0.0
  %1141 = vmatpush1.msra.mxu0 0.0
  %1142 = vmatprep.subr.mxu0 0.0
  %1143 = vmatpush1.msra.mxu0 0.0
  %1144 = vmatprep.subr.mxu0 0.0
  %1145 = vmatpush1.msra.mxu0 0.0
  %1146 = vmatprep.subr.mxu0 0.0
  %1147 = vmatpush1.msra.mxu0 0.0
  %1148 = vmatprep.subr.mxu0 0.0
  %1149 = vmatpush1.msra.mxu0 0.0
  %1150 = vmatprep.subr.mxu0 0.0
  %1151 = vmatpush1.msra.mxu0 0.0
  %1152 = vmatprep.subr.mxu0 0.0
  %1153 = vmatpush1.msra.mxu0 0.0
  %1154 = vmatprep.subr.mxu0 0.0
  %1155 = vmatpush1.msra.mxu0 0.0
  %1156 = vmatprep.subr.mxu0 0.0
  %1157 = vmatpush1.msra.mxu0 0.0
  %1158 = vmatprep.subr.mxu0 0.0
  %1159 = vmatpush1.msra.mxu0 0.0
  %1160 = vmatprep.subr.mxu0 0.0
  %1161 = vmatpush1.msra.mxu0 0.0
  %1162 = vmatprep.subr.mxu0 0.0
  %1163 = vmatpush1.msra.mxu0 0.0
  %1164 = vmatprep.subr.mxu0 0.0
  %1165 = vmatpush1.msra.mxu0 0.0
  %1166 = vmatprep.subr.mxu0 0.0
  %1167 = vmatpush1.msra.mxu0 0.0
  %1168 = vmatprep.subr.mxu0 0.0
  %1169 = vmatpush1.msra.mxu0 0.0
  %1170 = vmatprep.subr.mxu0 0.0
  %1171 = vmatpush1.msra.mxu0 0.0
  %1172 = vmatprep.subr.mxu0 0.0
  %1173 = vmatpush1.msra.mxu0 0.0
  %1174 = vmatprep.subr.mxu0 0.0
  %1175 = vmatpush1.msra.mxu0 0.0
  %1176 = vmatprep.subr.mxu0 0.0
  %1177 = vmatpush1.msra.mxu0 0.0
  %1178 = vmatprep.subr.mxu0 0.0
  %1179 = vmatpush1.msra.mxu0 0.0
  %1180 = vmatprep.subr.mxu0 0.0
  %1181 = vmatpush1.msra.mxu0 0.0
  %1182 = vmatprep.subr.mxu0 0.0
  %1183 = vmatpush1.msra.mxu0 0.0
  %1184 = vmatprep.subr.mxu0 0.0
  %1185 = vmatpush1.msra.mxu0 0.0
  %1186 = vmatprep.subr.mxu0 0.0
  %1187 = vmatpush1.msra.mxu0 0.0
  %1188 = vmatprep.mubr.f32.mxu0 0.0
  %v1189 = vand.u32 %v681, 4294901760
  %1190 = vmatmul.mubr.f32.gmra.mrb[0].mxu0 %v1189
  %v1191 = vpop.f32.mrb[0].mxu0
  %v1192 = vadd.f32 %v1085, %v1191
  %v1193 = vpop.f32.mrb[0].mxu0
  %1194 = vmatprep.mubr.f32.mxu0 0.0
  %v1195 = vand.u32 %v684, 4294901760
  %1196 = vmatmul.mubr.f32.gmra.mrb[0].mxu0 %v1195
  %v1197 = vpop.f32.mrb[0].mxu0
  %v1198 = vadd.f32 %v1093, %v1197
  %v1199 = vpop.f32.mrb[0].mxu0
  %1200 = vmatprep.mubr.f32.mxu0 0.0
  %v1201 = vand.u32 %v687, 4294901760
  %1202 = vmatmul.mubr.f32.gmra.mrb[0].mxu0 %v1201
  %v1203 = vpop.f32.mrb[0].mxu0
  %v1204 = vadd.f32 %v1101, %v1203
  %v1205 = vpop.f32.mrb[0].mxu0
  %1206 = vmatprep.mubr.f32.mxu0 0.0
  %v1207 = vand.u32 %v690, 4294901760
  %1208 = vmatmul.mubr.f32.gmra.mrb[0].mxu0 %v1207
  %v1209 = vpop.f32.mrb[0].mxu0
  %v1210 = vadd.f32 %v1109, %v1209
  %v1211 = vpop.f32.mrb[0].mxu0
  %1212 = vdwg.mxu0
  %1213 = vmatprep.subr.mxu0 0.0
  %v1214 = vand.u32 %v647, 4294901760
  %1215 = vmatpush1.msra.mxu0 %v1214
  %1216 = vmatprep.subr.mxu0 0.0
  %v1217 = vand.u32 %v648, 4294901760
  %1218 = vmatpush1.msra.mxu0 %v1217
  %1219 = vmatprep.subr.mxu0 0.0
  %v1220 = vand.u32 %v649, 4294901760
  %1221 = vmatpush1.msra.mxu0 %v1220
  %1222 = vmatprep.subr.mxu0 0.0
  %v1223 = vand.u32 %v650, 4294901760
  %1224 = vmatpush1.msra.mxu0 %v1223
  %1225 = vmatprep.subr.mxu0 0.0
  %1226 = vmatpush1.msra.mxu0 0.0
  %1227 = vmatprep.subr.mxu0 0.0
  %1228 = vmatpush1.msra.mxu0 0.0
  %1229 = vmatprep.subr.mxu0 0.0
  %1230 = vmatpush1.msra.mxu0 0.0
  %1231 = vmatprep.subr.mxu0 0.0
  %1232 = vmatpush1.msra.mxu0 0.0
  %1233 = vmatprep.subr.mxu0 0.0
  %1234 = vmatpush1.msra.mxu0 0.0
  %1235 = vmatprep.subr.mxu0 0.0
  %1236 = vmatpush1.msra.mxu0 0.0
  %1237 = vmatprep.subr.mxu0 0.0
  %1238 = vmatpush1.msra.mxu0 0.0
  %1239 = vmatprep.subr.mxu0 0.0
  %1240 = vmatpush1.msra.mxu0 0.0
  %1241 = vmatprep.subr.mxu0 0.0
  %1242 = vmatpush1.msra.mxu0 0.0
  %1243 = vmatprep.subr.mxu0 0.0
  %1244 = vmatpush1.msra.mxu0 0.0
  %1245 = vmatprep.subr.mxu0 0.0
  %1246 = vmatpush1.msra.mxu0 0.0
  %1247 = vmatprep.subr.mxu0 0.0
  %1248 = vmatpush1.msra.mxu0 0.0
  %1249 = vmatprep.subr.mxu0 0.0
  %1250 = vmatpush1.msra.mxu0 0.0
  %1251 = vmatprep.subr.mxu0 0.0
  %1252 = vmatpush1.msra.mxu0 0.0
  %1253 = vmatprep.subr.mxu0 0.0
  %1254 = vmatpush1.msra.mxu0 0.0
  %1255 = vmatprep.subr.mxu0 0.0
  %1256 = vmatpush1.msra.mxu0 0.0
  %1257 = vmatprep.subr.mxu0 0.0
  %1258 = vmatpush1.msra.mxu0 0.0
  %1259 = vmatprep.subr.mxu0 0.0
  %1260 = vmatpush1.msra.mxu0 0.0
  %1261 = vmatprep.subr.mxu0 0.0
  %1262 = vmatpush1.msra.mxu0 0.0
  %1263 = vmatprep.subr.mxu0 0.0
  %1264 = vmatpush1.msra.mxu0 0.0
  %1265 = vmatprep.subr.mxu0 0.0
  %1266 = vmatpush1.msra.mxu0 0.0
  %1267 = vmatprep.subr.mxu0 0.0
  %1268 = vmatpush1.msra.mxu0 0.0
  %1269 = vmatprep.subr.mxu0 0.0
  %1270 = vmatpush1.msra.mxu0 0.0
  %1271 = vmatprep.subr.mxu0 0.0
  %1272 = vmatpush1.msra.mxu0 0.0
  %1273 = vmatprep.subr.mxu0 0.0
  %1274 = vmatpush1.msra.mxu0 0.0
  %1275 = vmatprep.subr.mxu0 0.0
  %1276 = vmatpush1.msra.mxu0 0.0
  %1277 = vmatprep.subr.mxu0 0.0
  %1278 = vmatpush1.msra.mxu0 0.0
  %1279 = vmatprep.subr.mxu0 0.0
  %1280 = vmatpush1.msra.mxu0 0.0
  %1281 = vmatprep.mubr.f32.mxu0 0.0
  %v1282 = vand.u32 %v681, 4294901760
  %1283 = vmatmul.mubr.f32.gmra.mrb[0].mxu0 %v1282
  %v1284 = vpop.f32.mrb[0].mxu0
  %v1285 = vadd.f32 %v1192, %v1284
  %v1286 = vpop.f32.mrb[0].mxu0
  %1287 = vmatprep.mubr.f32.mxu0 0.0
  %v1288 = vand.u32 %v684, 4294901760
  %1289 = vmatmul.mubr.f32.gmra.mrb[0].mxu0 %v1288
  %v1290 = vpop.f32.mrb[0].mxu0
  %v1291 = vadd.f32 %v1198, %v1290
  %v1292 = vpop.f32.mrb[0].mxu0
  %1293 = vmatprep.mubr.f32.mxu0 0.0
  %v1294 = vand.u32 %v687, 4294901760
  %1295 = vmatmul.mubr.f32.gmra.mrb[0].mxu0 %v1294
  %v1296 = vpop.f32.mrb[0].mxu0
  %v1297 = vadd.f32 %v1204, %v1296
  %v1298 = vpop.f32.mrb[0].mxu0
  %1299 = vmatprep.mubr.f32.mxu0 0.0
  %v1300 = vand.u32 %v690, 4294901760
  %1301 = vmatmul.mubr.f32.gmra.mrb[0].mxu0 %v1300
  %v1302 = vpop.f32.mrb[0].mxu0
  %v1303 = vadd.f32 %v1210, %v1302
  %v1304 = vpop.f32.mrb[0].mxu0
  %1305 = vdwg.mxu0
  %v1306 = vtanh.pop %v1285
  %v1307 = vtanh.pop %v1291
  %v1308 = vtanh.pop %v1297
  %v1309 = vtanh.pop %v1303
  %v1310 = vld [vmem:[%s5] sm:$0x3]
  %v1311 = vld [vmem:[%s6] sm:$0x3]
  %1313 = vset.pattern.permute.xlu0 0
  %1314 = vperm.xlu0 %1313, %v1311
  %v1315 = vpop.permute.xlu0 %1314
  %v1318 = vsel %vm679, %v1310, 0
  %1320 = vmatprep.subr.mxu0 0.0
  %v1321 = vand.u32 %v1306, 4294901760
  %1322 = vmatpush1.msra.mxu0 %v1321
  %1323 = vmatprep.subr.mxu0 0.0
  %v1324 = vand.u32 %v1307, 4294901760
  %1325 = vmatpush1.msra.mxu0 %v1324
  %1326 = vmatprep.subr.mxu0 0.0
  %v1327 = vand.u32 %v1308, 4294901760
  %1328 = vmatpush1.msra.mxu0 %v1327
  %1329 = vmatprep.subr.mxu0 0.0
  %v1330 = vand.u32 %v1309, 4294901760
  %1331 = vmatpush1.msra.mxu0 %v1330
  %1332 = vmatprep.subr.mxu0 0.0
  %1333 = vmatpush1.msra.mxu0 0.0
  %1334 = vmatprep.subr.mxu0 0.0
  %1335 = vmatpush1.msra.mxu0 0.0
  %1336 = vmatprep.subr.mxu0 0.0
  %1337 = vmatpush1.msra.mxu0 0.0
  %1338 = vmatprep.subr.mxu0 0.0
  %1339 = vmatpush1.msra.mxu0 0.0
  %1340 = vmatprep.subr.mxu0 0.0
  %1341 = vmatpush1.msra.mxu0 0.0
  %1342 = vmatprep.subr.mxu0 0.0
  %1343 = vmatpush1.msra.mxu0 0.0
  %1344 = vmatprep.subr.mxu0 0.0
  %1345 = vmatpush1.msra.mxu0 0.0
  %1346 = vmatprep.subr.mxu0 0.0
  %1347 = vmatpush1.msra.mxu0 0.0
  %1348 = vmatprep.subr.mxu0 0.0
  %1349 = vmatpush1.msra.mxu0 0.0
  %1350 = vmatprep.subr.mxu0 0.0
  %1351 = vmatpush1.msra.mxu0 0.0
  %1352 = vmatprep.subr.mxu0 0.0
  %1353 = vmatpush1.msra.mxu0 0.0
  %1354 = vmatprep.subr.mxu0 0.0
  %1355 = vmatpush1.msra.mxu0 0.0
  %1356 = vmatprep.subr.mxu0 0.0
  %1357 = vmatpush1.msra.mxu0 0.0
  %1358 = vmatprep.subr.mxu0 0.0
  %1359 = vmatpush1.msra.mxu0 0.0
  %1360 = vmatprep.subr.mxu0 0.0
  %1361 = vmatpush1.msra.mxu0 0.0
  %1362 = vmatprep.subr.mxu0 0.0
  %1363 = vmatpush1.msra.mxu0 0.0
  %1364 = vmatprep.subr.mxu0 0.0
  %1365 = vmatpush1.msra.mxu0 0.0
  %1366 = vmatprep.subr.mxu0 0.0
  %1367 = vmatpush1.msra.mxu0 0.0
  %1368 = vmatprep.subr.mxu0 0.0
  %1369 = vmatpush1.msra.mxu0 0.0
  %1370 = vmatprep.subr.mxu0 0.0
  %1371 = vmatpush1.msra.mxu0 0.0
  %1372 = vmatprep.subr.mxu0 0.0
  %1373 = vmatpush1.msra.mxu0 0.0
  %1374 = vmatprep.subr.mxu0 0.0
  %1375 = vmatpush1.msra.mxu0 0.0
  %1376 = vmatprep.subr.mxu0 0.0
  %1377 = vmatpush1.msra.mxu0 0.0
  %1378 = vmatprep.subr.mxu0 0.0
  %1379 = vmatpush1.msra.mxu0 0.0
  %1380 = vmatprep.subr.mxu0 0.0
  %1381 = vmatpush1.msra.mxu0 0.0
  %1382 = vmatprep.subr.mxu0 0.0
  %1383 = vmatpush1.msra.mxu0 0.0
  %1384 = vmatprep.subr.mxu0 0.0
  %1385 = vmatpush1.msra.mxu0 0.0
  %1386 = vmatprep.subr.mxu0 0.0
  %1387 = vmatpush1.msra.mxu0 0.0
  %1388 = vmatprep.mubr.f32.mxu0 0.0
  %v1389 = vand.u32 %v1318, 4294901760
  %v1390 = vsub.f32 %v1318, %v1389
  %v1391 = vand.u32 %v1390, 4294901760
  %v1392 = vsub.f32 %v1390, %v1391
  %v1393 = vand.u32 %v1392, 4294901760
  %1394 = vmatmul.mubr.f32.gmra.mrb[0].mxu0 %v1393
  %v1395 = vpop.f32.mrb[0].mxu0
  %v1396 = vadd.f32 %v1315, %v1395
  %v1397 = vpop.f32.mrb[0].mxu0
  %1398 = vdwg.mxu0
  %1399 = vmatprep.subr.mxu0 0.0
  %v1400 = vand.u32 %v1306, 4294901760
  %v1401 = vsub.f32 %v1306, %v1400
  %v1402 = vand.u32 %v1401, 4294901760
  %v1403 = vsub.f32 %v1401, %v1402
  %v1404 = vand.u32 %v1403, 4294901760
  %1405 = vmatpush1.msra.mxu0 %v1404
  %1406 = vmatprep.subr.mxu0 0.0
  %v1407 = vand.u32 %v1307, 4294901760
  %v1408 = vsub.f32 %v1307, %v1407
  %v1409 = vand.u32 %v1408, 4294901760
  %v1410 = vsub.f32 %v1408, %v1409
  %v1411 = vand.u32 %v1410, 4294901760
  %1412 = vmatpush1.msra.mxu0 %v1411
  %1413 = vmatprep.subr.mxu0 0.0
  %v1414 = vand.u32 %v1308, 4294901760
  %v1415 = vsub.f32 %v1308, %v1414
  %v1416 = vand.u32 %v1415, 4294901760
  %v1417 = vsub.f32 %v1415, %v1416
  %v1418 = vand.u32 %v1417, 4294901760
  %1419 = vmatpush1.msra.mxu0 %v1418
  %1420 = vmatprep.subr.mxu0 0.0
  %v1421 = vand.u32 %v1309, 4294901760
  %v1422 = vsub.f32 %v1309, %v1421
  %v1423 = vand.u32 %v1422, 4294901760
  %v1424 = vsub.f32 %v1422, %v1423
  %v1425 = vand.u32 %v1424, 4294901760
  %1426 = vmatpush1.msra.mxu0 %v1425
  %1427 = vmatprep.subr.mxu0 0.0
  %1428 = vmatpush1.msra.mxu0 0.0
  %1429 = vmatprep.subr.mxu0 0.0
  %1430 = vmatpush1.msra.mxu0 0.0
  %1431 = vmatprep.subr.mxu0 0.0
  %1432 = vmatpush1.msra.mxu0 0.0
  %1433 = vmatprep.subr.mxu0 0.0
  %1434 = vmatpush1.msra.mxu0 0.0
  %1435 = vmatprep.subr.mxu0 0.0
  %1436 = vmatpush1.msra.mxu0 0.0
  %1437 = vmatprep.subr.mxu0 0.0
  %1438 = vmatpush1.msra.mxu0 0.0
  %1439 = vmatprep.subr.mxu0 0.0
  %1440 = vmatpush1.msra.mxu0 0.0
  %1441 = vmatprep.subr.mxu0 0.0
  %1442 = vmatpush1.msra.mxu0 0.0
  %1443 = vmatprep.subr.mxu0 0.0
  %1444 = vmatpush1.msra.mxu0 0.0
  %1445 = vmatprep.subr.mxu0 0.0
  %1446 = vmatpush1.msra.mxu0 0.0
  %1447 = vmatprep.subr.mxu0 0.0
  %1448 = vmatpush1.msra.mxu0 0.0
  %1449 = vmatprep.subr.mxu0 0.0
  %1450 = vmatpush1.msra.mxu0 0.0
  %1451 = vmatprep.subr.mxu0 0.0
  %1452 = vmatpush1.msra.mxu0 0.0
  %1453 = vmatprep.subr.mxu0 0.0
  %1454 = vmatpush1.msra.mxu0 0.0
  %1455 = vmatprep.subr.mxu0 0.0
  %1456 = vmatpush1.msra.mxu0 0.0
  %1457 = vmatprep.subr.mxu0 0.0
  %1458 = vmatpush1.msra.mxu0 0.0
  %1459 = vmatprep.subr.mxu0 0.0
  %1460 = vmatpush1.msra.mxu0 0.0
  %1461 = vmatprep.subr.mxu0 0.0
  %1462 = vmatpush1.msra.mxu0 0.0
  %1463 = vmatprep.subr.mxu0 0.0
  %1464 = vmatpush1.msra.mxu0 0.0
  %1465 = vmatprep.subr.mxu0 0.0
  %1466 = vmatpush1.msra.mxu0 0.0
  %1467 = vmatprep.subr.mxu0 0.0
  %1468 = vmatpush1.msra.mxu0 0.0
  %1469 = vmatprep.subr.mxu0 0.0
  %1470 = vmatpush1.msra.mxu0 0.0
  %1471 = vmatprep.subr.mxu0 0.0
  %1472 = vmatpush1.msra.mxu0 0.0
  %1473 = vmatprep.subr.mxu0 0.0
  %1474 = vmatpush1.msra.mxu0 0.0
  %1475 = vmatprep.subr.mxu0 0.0
  %1476 = vmatpush1.msra.mxu0 0.0
  %1477 = vmatprep.subr.mxu0 0.0
  %1478 = vmatpush1.msra.mxu0 0.0
  %1479 = vmatprep.subr.mxu0 0.0
  %1480 = vmatpush1.msra.mxu0 0.0
  %1481 = vmatprep.subr.mxu0 0.0
  %1482 = vmatpush1.msra.mxu0 0.0
  %1483 = vmatprep.mubr.f32.mxu0 0.0
  %v1484 = vand.u32 %v1318, 4294901760
  %1485 = vmatmul.mubr.f32.gmra.mrb[0].mxu0 %v1484
  %v1486 = vpop.f32.mrb[0].mxu0
  %v1487 = vadd.f32 %v1396, %v1486
  %v1488 = vpop.f32.mrb[0].mxu0
  %1489 = vdwg.mxu0
  %1490 = vmatprep.subr.mxu0 0.0
  %v1491 = vand.u32 %v1306, 4294901760
  %v1492 = vsub.f32 %v1306, %v1491
  %1493 = vmatpush1.msra.mxu0 %v1492
  %1494 = vmatprep.subr.mxu0 0.0
  %v1495 = vand.u32 %v1307, 4294901760
  %v1496 = vsub.f32 %v1307, %v1495
  %1497 = vmatpush1.msra.mxu0 %v1496
  %1498 = vmatprep.subr.mxu0 0.0
  %v1499 = vand.u32 %v1308, 4294901760
  %v1500 = vsub.f32 %v1308, %v1499
  %1501 = vmatpush1.msra.mxu0 %v1500
  %1502 = vmatprep.subr.mxu0 0.0
  %v1503 = vand.u32 %v1309, 4294901760
  %v1504 = vsub.f32 %v1309, %v1503
  %1505 = vmatpush1.msra.mxu0 %v1504
  %1506 = vmatprep.subr.mxu0 0.0
  %1507 = vmatpush1.msra.mxu0 0.0
  %1508 = vmatprep.subr.mxu0 0.0
  %1509 = vmatpush1.msra.mxu0 0.0
  %1510 = vmatprep.subr.mxu0 0.0
  %1511 = vmatpush1.msra.mxu0 0.0
  %1512 = vmatprep.subr.mxu0 0.0
  %1513 = vmatpush1.msra.mxu0 0.0
  %1514 = vmatprep.subr.mxu0 0.0
  %1515 = vmatpush1.msra.mxu0 0.0
  %1516 = vmatprep.subr.mxu0 0.0
  %1517 = vmatpush1.msra.mxu0 0.0
  %1518 = vmatprep.subr.mxu0 0.0
  %1519 = vmatpush1.msra.mxu0 0.0
  %1520 = vmatprep.subr.mxu0 0.0
  %1521 = vmatpush1.msra.mxu0 0.0
  %1522 = vmatprep.subr.mxu0 0.0
  %1523 = vmatpush1.msra.mxu0 0.0
  %1524 = vmatprep.subr.mxu0 0.0
  %1525 = vmatpush1.msra.mxu0 0.0
  %1526 = vmatprep.subr.mxu0 0.0
  %1527 = vmatpush1.msra.mxu0 0.0
  %1528 = vmatprep.subr.mxu0 0.0
  %1529 = vmatpush1.msra.mxu0 0.0
  %1530 = vmatprep.subr.mxu0 0.0
  %1531 = vmatpush1.msra.mxu0 0.0
  %1532 = vmatprep.subr.mxu0 0.0
  %1533 = vmatpush1.msra.mxu0 0.0
  %1534 = vmatprep.subr.mxu0 0.0
  %1535 = vmatpush1.msra.mxu0 0.0
  %1536 = vmatprep.subr.mxu0 0.0
  %1537 = vmatpush1.msra.mxu0 0.0
  %1538 = vmatprep.subr.mxu0 0.0
  %1539 = vmatpush1.msra.mxu0 0.0
  %1540 = vmatprep.subr.mxu0 0.0
  %1541 = vmatpush1.msra.mxu0 0.0
  %1542 = vmatprep.subr.mxu0 0.0
  %1543 = vmatpush1.msra.mxu0 0.0
  %1544 = vmatprep.subr.mxu0 0.0
  %1545 = vmatpush1.msra.mxu0 0.0
  %1546 = vmatprep.subr.mxu0 0.0
  %1547 = vmatpush1.msra.mxu0 0.0
  %1548 = vmatprep.subr.mxu0 0.0
  %1549 = vmatpush1.msra.mxu0 0.0
  %1550 = vmatprep.subr.mxu0 0.0
  %1551 = vmatpush1.msra.mxu0 0.0
  %1552 = vmatprep.subr.mxu0 0.0
  %1553 = vmatpush1.msra.mxu0 0.0
  %1554 = vmatprep.subr.mxu0 0.0
  %1555 = vmatpush1.msra.mxu0 0.0
  %1556 = vmatprep.subr.mxu0 0.0
  %1557 = vmatpush1.msra.mxu0 0.0
  %1558 = vmatprep.subr.mxu0 0.0
  %1559 = vmatpush1.msra.mxu0 0.0
  %1560 = vmatprep.subr.mxu0 0.0
  %1561 = vmatpush1.msra.mxu0 0.0
  %1562 = vmatprep.mubr.f32.mxu0 0.0
  %v1563 = vand.u32 %v1318, 4294901760
  %v1564 = vsub.f32 %v1318, %v1563
  %1565 = vmatmul.mubr.f32.gmra.mrb[0].mxu0 %v1564
  %v1566 = vpop.f32.mrb[0].mxu0
  %v1567 = vadd.f32 %v1487, %v1566
  %v1568 = vpop.f32.mrb[0].mxu0
  %1569 = vdwg.mxu0
  %1570 = vmatprep.subr.mxu0 0.0
  %v1571 = vand.u32 %v1306, 4294901760
  %1572 = vmatpush1.msra.mxu0 %v1571
  %1573 = vmatprep.subr.mxu0 0.0
  %v1574 = vand.u32 %v1307, 4294901760
  %1575 = vmatpush1.msra.mxu0 %v1574
  %1576 = vmatprep.subr.mxu0 0.0
  %v1577 = vand.u32 %v1308, 4294901760
  %1578 = vmatpush1.msra.mxu0 %v1577
  %1579 = vmatprep.subr.mxu0 0.0
  %v1580 = vand.u32 %v1309, 4294901760
  %1581 = vmatpush1.msra.mxu0 %v1580
  %1582 = vmatprep.subr.mxu0 0.0
  %1583 = vmatpush1.msra.mxu0 0.0
  %1584 = vmatprep.subr.mxu0 0.0
  %1585 = vmatpush1.msra.mxu0 0.0
  %1586 = vmatprep.subr.mxu0 0.0
  %1587 = vmatpush1.msra.mxu0 0.0
  %1588 = vmatprep.subr.mxu0 0.0
  %1589 = vmatpush1.msra.mxu0 0.0
  %1590 = vmatprep.subr.mxu0 0.0
  %1591 = vmatpush1.msra.mxu0 0.0
  %1592 = vmatprep.subr.mxu0 0.0
  %1593 = vmatpush1.msra.mxu0 0.0
  %1594 = vmatprep.subr.mxu0 0.0
  %1595 = vmatpush1.msra.mxu0 0.0
  %1596 = vmatprep.subr.mxu0 0.0
  %1597 = vmatpush1.msra.mxu0 0.0
  %1598 = vmatprep.subr.mxu0 0.0
  %1599 = vmatpush1.msra.mxu0 0.0
  %1600 = vmatprep.subr.mxu0 0.0
  %1601 = vmatpush1.msra.mxu0 0.0
  %1602 = vmatprep.subr.mxu0 0.0
  %1603 = vmatpush1.msra.mxu0 0.0
  %1604 = vmatprep.subr.mxu0 0.0
  %1605 = vmatpush1.msra.mxu0 0.0
  %1606 = vmatprep.subr.mxu0 0.0
  %1607 = vmatpush1.msra.mxu0 0.0
  %1608 = vmatprep.subr.mxu0 0.0
  %1609 = vmatpush1.msra.mxu0 0.0
  %1610 = vmatprep.subr.mxu0 0.0
  %1611 = vmatpush1.msra.mxu0 0.0
  %1612 = vmatprep.subr.mxu0 0.0
  %1613 = vmatpush1.msra.mxu0 0.0
  %1614 = vmatprep.subr.mxu0 0.0
  %1615 = vmatpush1.msra.mxu0 0.0
  %1616 = vmatprep.subr.mxu0 0.0
  %1617 = vmatpush1.msra.mxu0 0.0
  %1618 = vmatprep.subr.mxu0 0.0
  %1619 = vmatpush1.msra.mxu0 0.0
  %1620 = vmatprep.subr.mxu0 0.0
  %1621 = vmatpush1.msra.mxu0 0.0
  %1622 = vmatprep.subr.mxu0 0.0
  %1623 = vmatpush1.msra.mxu0 0.0
  %1624 = vmatprep.subr.mxu0 0.0
  %1625 = vmatpush1.msra.mxu0 0.0
  %1626 = vmatprep.subr.mxu0 0.0
  %1627 = vmatpush1.msra.mxu0 0.0
  %1628 = vmatprep.subr.mxu0 0.0
  %1629 = vmatpush1.msra.mxu0 0.0
  %1630 = vmatprep.subr.mxu0 0.0
  %1631 = vmatpush1.msra.mxu0 0.0
  %1632 = vmatprep.subr.mxu0 0.0
  %1633 = vmatpush1.msra.mxu0 0.0
  %1634 = vmatprep.subr.mxu0 0.0
  %1635 = vmatpush1.msra.mxu0 0.0
  %1636 = vmatprep.subr.mxu0 0.0
  %1637 = vmatpush1.msra.mxu0 0.0
  %1638 = vmatprep.mubr.f32.mxu0 0.0
  %v1639 = vand.u32 %v1318, 4294901760
  %v1640 = vsub.f32 %v1318, %v1639
  %v1641 = vand.u32 %v1640, 4294901760
  %1642 = vmatmul.mubr.f32.gmra.mrb[0].mxu0 %v1641
  %v1643 = vpop.f32.mrb[0].mxu0
  %v1644 = vadd.f32 %v1567, %v1643
  %v1645 = vpop.f32.mrb[0].mxu0
  %1646 = vdwg.mxu0
  %1647 = vmatprep.subr.mxu0 0.0
  %v1648 = vand.u32 %v1306, 4294901760
  %v1649 = vsub.f32 %v1306, %v1648
  %v1650 = vand.u32 %v1649, 4294901760
  %1651 = vmatpush1.msra.mxu0 %v1650
  %1652 = vmatprep.subr.mxu0 0.0
  %v1653 = vand.u32 %v1307, 4294901760
  %v1654 = vsub.f32 %v1307, %v1653
  %v1655 = vand.u32 %v1654, 4294901760
  %1656 = vmatpush1.msra.mxu0 %v1655
  %1657 = vmatprep.subr.mxu0 0.0
  %v1658 = vand.u32 %v1308, 4294901760
  %v1659 = vsub.f32 %v1308, %v1658
  %v1660 = vand.u32 %v1659, 4294901760
  %1661 = vmatpush1.msra.mxu0 %v1660
  %1662 = vmatprep.subr.mxu0 0.0
  %v1663 = vand.u32 %v1309, 4294901760
  %v1664 = vsub.f32 %v1309, %v1663
  %v1665 = vand.u32 %v1664, 4294901760
  %1666 = vmatpush1.msra.mxu0 %v1665
  %1667 = vmatprep.subr.mxu0 0.0
  %1668 = vmatpush1.msra.mxu0 0.0
  %1669 = vmatprep.subr.mxu0 0.0
  %1670 = vmatpush1.msra.mxu0 0.0
  %1671 = vmatprep.subr.mxu0 0.0
  %1672 = vmatpush1.msra.mxu0 0.0
  %1673 = vmatprep.subr.mxu0 0.0
  %1674 = vmatpush1.msra.mxu0 0.0
  %1675 = vmatprep.subr.mxu0 0.0
  %1676 = vmatpush1.msra.mxu0 0.0
  %1677 = vmatprep.subr.mxu0 0.0
  %1678 = vmatpush1.msra.mxu0 0.0
  %1679 = vmatprep.subr.mxu0 0.0
  %1680 = vmatpush1.msra.mxu0 0.0
  %1681 = vmatprep.subr.mxu0 0.0
  %1682 = vmatpush1.msra.mxu0 0.0
  %1683 = vmatprep.subr.mxu0 0.0
  %1684 = vmatpush1.msra.mxu0 0.0
  %1685 = vmatprep.subr.mxu0 0.0
  %1686 = vmatpush1.msra.mxu0 0.0
  %1687 = vmatprep.subr.mxu0 0.0
  %1688 = vmatpush1.msra.mxu0 0.0
  %1689 = vmatprep.subr.mxu0 0.0
  %1690 = vmatpush1.msra.mxu0 0.0
  %1691 = vmatprep.subr.mxu0 0.0
  %1692 = vmatpush1.msra.mxu0 0.0
  %1693 = vmatprep.subr.mxu0 0.0
  %1694 = vmatpush1.msra.mxu0 0.0
  %1695 = vmatprep.subr.mxu0 0.0
  %1696 = vmatpush1.msra.mxu0 0.0
  %1697 = vmatprep.subr.mxu0 0.0
  %1698 = vmatpush1.msra.mxu0 0.0
  %1699 = vmatprep.subr.mxu0 0.0
  %1700 = vmatpush1.msra.mxu0 0.0
  %1701 = vmatprep.subr.mxu0 0.0
  %1702 = vmatpush1.msra.mxu0 0.0
  %1703 = vmatprep.subr.mxu0 0.0
  %1704 = vmatpush1.msra.mxu0 0.0
  %1705 = vmatprep.subr.mxu0 0.0
  %1706 = vmatpush1.msra.mxu0 0.0
  %1707 = vmatprep.subr.mxu0 0.0
  %1708 = vmatpush1.msra.mxu0 0.0
  %1709 = vmatprep.subr.mxu0 0.0
  %1710 = vmatpush1.msra.mxu0 0.0
  %1711 = vmatprep.subr.mxu0 0.0
  %1712 = vmatpush1.msra.mxu0 0.0
  %1713 = vmatprep.subr.mxu0 0.0
  %1714 = vmatpush1.msra.mxu0 0.0
  %1715 = vmatprep.subr.mxu0 0.0
  %1716 = vmatpush1.msra.mxu0 0.0
  %1717 = vmatprep.subr.mxu0 0.0
  %1718 = vmatpush1.msra.mxu0 0.0
  %1719 = vmatprep.subr.mxu0 0.0
  %1720 = vmatpush1.msra.mxu0 0.0
  %1721 = vmatprep.subr.mxu0 0.0
  %1722 = vmatpush1.msra.mxu0 0.0
  %1723 = vmatprep.mubr.f32.mxu0 0.0
  %v1724 = vand.u32 %v1318, 4294901760
  %1725 = vmatmul.mubr.f32.gmra.mrb[0].mxu0 %v1724
  %v1726 = vpop.f32.mrb[0].mxu0
  %v1727 = vadd.f32 %v1644, %v1726
  %v1728 = vpop.f32.mrb[0].mxu0
  %1729 = vdwg.mxu0
  %1730 = vmatprep.subr.mxu0 0.0
  %v1731 = vand.u32 %v1306, 4294901760
  %1732 = vmatpush1.msra.mxu0 %v1731
  %1733 = vmatprep.subr.mxu0 0.0
  %v1734 = vand.u32 %v1307, 4294901760
  %1735 = vmatpush1.msra.mxu0 %v1734
  %1736 = vmatprep.subr.mxu0 0.0
  %v1737 = vand.u32 %v1308, 4294901760
  %1738 = vmatpush1.msra.mxu0 %v1737
  %1739 = vmatprep.subr.mxu0 0.0
  %v1740 = vand.u32 %v1309, 4294901760
  %1741 = vmatpush1.msra.mxu0 %v1740
  %1742 = vmatprep.subr.mxu0 0.0
  %1743 = vmatpush1.msra.mxu0 0.0
  %1744 = vmatprep.subr.mxu0 0.0
  %1745 = vmatpush1.msra.mxu0 0.0
  %1746 = vmatprep.subr.mxu0 0.0
  %1747 = vmatpush1.msra.mxu0 0.0
  %1748 = vmatprep.subr.mxu0 0.0
  %1749 = vmatpush1.msra.mxu0 0.0
  %1750 = vmatprep.subr.mxu0 0.0
  %1751 = vmatpush1.msra.mxu0 0.0
  %1752 = vmatprep.subr.mxu0 0.0
  %1753 = vmatpush1.msra.mxu0 0.0
  %1754 = vmatprep.subr.mxu0 0.0
  %1755 = vmatpush1.msra.mxu0 0.0
  %1756 = vmatprep.subr.mxu0 0.0
  %1757 = vmatpush1.msra.mxu0 0.0
  %1758 = vmatprep.subr.mxu0 0.0
  %1759 = vmatpush1.msra.mxu0 0.0
  %1760 = vmatprep.subr.mxu0 0.0
  %1761 = vmatpush1.msra.mxu0 0.0
  %1762 = vmatprep.subr.mxu0 0.0
  %1763 = vmatpush1.msra.mxu0 0.0
  %1764 = vmatprep.subr.mxu0 0.0
  %1765 = vmatpush1.msra.mxu0 0.0
  %1766 = vmatprep.subr.mxu0 0.0
  %1767 = vmatpush1.msra.mxu0 0.0
  %1768 = vmatprep.subr.mxu0 0.0
  %1769 = vmatpush1.msra.mxu0 0.0
  %1770 = vmatprep.subr.mxu0 0.0
  %1771 = vmatpush1.msra.mxu0 0.0
  %1772 = vmatprep.subr.mxu0 0.0
  %1773 = vmatpush1.msra.mxu0 0.0
  %1774 = vmatprep.subr.mxu0 0.0
  %1775 = vmatpush1.msra.mxu0 0.0
  %1776 = vmatprep.subr.mxu0 0.0
  %1777 = vmatpush1.msra.mxu0 0.0
  %1778 = vmatprep.subr.mxu0 0.0
  %1779 = vmatpush1.msra.mxu0 0.0
  %1780 = vmatprep.subr.mxu0 0.0
  %1781 = vmatpush1.msra.mxu0 0.0
  %1782 = vmatprep.subr.mxu0 0.0
  %1783 = vmatpush1.msra.mxu0 0.0
  %1784 = vmatprep.subr.mxu0 0.0
  %1785 = vmatpush1.msra.mxu0 0.0
  %1786 = vmatprep.subr.mxu0 0.0
  %1787 = vmatpush1.msra.mxu0 0.0
  %1788 = vmatprep.subr.mxu0 0.0
  %1789 = vmatpush1.msra.mxu0 0.0
  %1790 = vmatprep.subr.mxu0 0.0
  %1791 = vmatpush1.msra.mxu0 0.0
  %1792 = vmatprep.subr.mxu0 0.0
  %1793 = vmatpush1.msra.mxu0 0.0
  %1794 = vmatprep.subr.mxu0 0.0
  %1795 = vmatpush1.msra.mxu0 0.0
  %1796 = vmatprep.subr.mxu0 0.0
  %1797 = vmatpush1.msra.mxu0 0.0
  %1798 = vmatprep.mubr.f32.mxu0 0.0
  %v1799 = vand.u32 %v1318, 4294901760
  %1800 = vmatmul.mubr.f32.gmra.mrb[0].mxu0 %v1799
  %v1801 = vpop.f32.mrb[0].mxu0
  %v1802 = vadd.f32 %v1727, %v1801
  %v1803 = vpop.f32.mrb[0].mxu0
  %1804 = vdwg.mxu0
  %1805 = vst [vmem:[%s7] sm:$0x3] %v1802
  // Predicated region
  $region30: #{mlp_forward.1} parent=0 // pred_check
    _
  $region31: #{mlp_forward.1} parent=0 // pred_check_branch
    %1807 = sbr.rel (0) target = $region33
  $region32: #{mlp_forward.1} parent=0 // pred_region
    _
  $region33: #{mlp_forward.1} parent=0 // pred_fallthru
    _
  // Predicated region
  $region34: #{mlp_forward.1} parent=0 // pred_check
    _
  $region35: #{mlp_forward.1} parent=0 // pred_check_branch
    %1809 = sbr.rel (0) target = $region37
  $region36: #{mlp_forward.1} parent=0 // pred_region
    _
  $region37: #{mlp_forward.1} parent=0 // pred_fallthru
    _

</llo_original>
